<compile_context>
chip_gen: v7x
topology: tpu7x:2x2x1
jax: 0.10.0
libtpu: 0.0.40
codegen_flags: <defaults>
</compile_context>

<pallas_src>
import functools
import math

import jax
import jax.numpy as jnp
from jax.experimental import pallas as pl
from jax.experimental.pallas import tpu as pltpu


def _one_side_kernel(src_ref, tgt_ref, sbias_ref, tmask_ref,
                     wkey_ref, bkey_ref, wval_ref, bval_ref,
                     wq_ref, bq_ref, wout_t_ref, wout_u_ref, bout_ref,
                     out_ref, *, batch_block, num_src, num_tgt,
                     num_head, head_dim):
    f32 = jnp.float32
    bf16 = jnp.bfloat16
    Bb, Ns, Nt, H, hd = batch_block, num_src, num_tgt, num_head, head_dim

    # ---- fused projections over the whole batch block (bf16 in, f32 acc) ----
    src_bf = src_ref[...].astype(bf16)                      # (Bb*Ns, Ds)
    tgt_bf = tgt_ref[...].astype(bf16)                      # (Bb*Nt, Dt)

    key = (jnp.dot(src_bf, wkey_ref[...],
                   preferred_element_type=f32) + bkey_ref[...])       # (Bb*Ns, O)
    val = (jnp.dot(src_bf, wval_ref[...],
                   preferred_element_type=f32) + bval_ref[...])       # (Bb*Ns, O)
    # 1/sqrt(hd) is pre-folded into wq/bq; tgt mask (0/1) applied as in the ref.
    qry = (jnp.dot(tgt_bf, wq_ref[...],
                   preferred_element_type=f32) + bq_ref[...]) * tmask_ref[...]

    # tgt part of the (split) output projection — lane-dense Op-wide slab.
    out_ref[...] = (jnp.dot(tgt_bf, wout_t_ref[...],
                            preferred_element_type=f32)
                    + bout_ref[...]).astype(out_ref.dtype)            # (Bb*Nt, Op)

    key_bf = key.astype(bf16)
    val_bf = val.astype(bf16)
    qry_bf = qry.astype(bf16)
    sbias = sbias_ref[...]                                   # (Bb, Ns) f32 additive bias

    qkt_dims = (((1,), (1,)), ((), ()))                      # contract head_dim

    # ---- attention: short static loops over batch block and heads ----
    for b in range(Bb):
        k_b = key_bf[b * Ns:(b + 1) * Ns, :]                 # (Ns, O)
        v_b = val_bf[b * Ns:(b + 1) * Ns, :]                 # (Ns, O)
        q_b = qry_bf[b * Nt:(b + 1) * Nt, :]                 # (Nt, O)
        bias_b = sbias[b:b + 1, :]                           # (1, Ns)

        upd = None
        for h in range(H):
            q_h = q_b[:, h * hd:(h + 1) * hd]                # (Nt, hd)
            k_h = k_b[:, h * hd:(h + 1) * hd]                # (Ns, hd)
            v_h = v_b[:, h * hd:(h + 1) * hd]                # (Ns, hd)

            scores = jax.lax.dot_general(
                q_h, k_h, qkt_dims, preferred_element_type=f32) + bias_b  # (Nt, Ns)

            m = jnp.max(scores, axis=-1, keepdims=True)
            e = jnp.exp(scores - m)
            p = e * pl.reciprocal(jnp.sum(e, axis=-1, keepdims=True), approx=True)

            uh = jnp.dot(p.astype(bf16), v_h,
                         preferred_element_type=f32)          # (Nt, hd)
            # Fuse into the output projection via the per-head weight slice
            # (sublane slice of the weight -> no lane-axis concat anywhere).
            contrib = jnp.dot(uh.astype(bf16),
                              wout_u_ref[h * hd:(h + 1) * hd, :],
                              preferred_element_type=f32)     # (Nt, Op)
            upd = contrib if upd is None else upd + contrib

        rows = slice(b * Nt, (b + 1) * Nt)
        out_ref[rows, :] = out_ref[rows, :] + upd.astype(out_ref.dtype)


def one_side_inter_modality_update(src, tgt, src_mask, tgt_mask, params,
                                   *, output_size, num_head, batch_block=None):
    B, Ns, Ds = src.shape
    _, Nt, Dt = tgt.shape
    O = output_size
    H = num_head
    hd = O // H
    scale = 1.0 / math.sqrt(hd)

    # Batch fusion: Bb batch elements per grid step (Bb == B for small B;
    # if Bb < B it must keep sublane alignment, i.e. Bb*Ns and Bb*Nt % 8 == 0).
    Bb = B if batch_block is None else batch_block
    assert B % Bb == 0

    # Lane-dense padded output width.
    Op = ((O + 127) // 128) * 128

    wsrc, bsrc = params["wsrc"], params["bsrc"]   # (Ds, 2O), (1, 2O)
    wtgt, btgt = params["wtgt"], params["btgt"]   # (Dt, O),  (1, O)
    wout, bout = params["wout"], params["bout"]   # (Dt+O, O), (1, O)

    # Host-side weight surgery (removes all in-kernel lane concats/splits).
    wkey = wsrc[:, :O].astype(jnp.bfloat16)
    wval = wsrc[:, O:].astype(jnp.bfloat16)
    bkey = bsrc[:, :O].astype(jnp.float32)
    bval = bsrc[:, O:].astype(jnp.float32)
    wq = (wtgt * scale).astype(jnp.bfloat16)               # fold 1/sqrt(hd)
    bq = (btgt * scale).astype(jnp.float32)
    wout_t = jnp.zeros((Dt, Op), jnp.float32).at[:, :O].set(wout[:Dt, :]).astype(jnp.bfloat16)
    wout_u = jnp.zeros((O, Op), jnp.float32).at[:, :O].set(wout[Dt:, :]).astype(jnp.bfloat16)
    bout_p = jnp.zeros((1, Op), jnp.float32).at[:, :O].set(bout)

    # 2-D slabs for the fused projections / lane-dense output.
    src2d = src.reshape(B * Ns, Ds)
    tgt2d = tgt.reshape(B * Nt, Dt)
    # Additive score bias: 0 where valid, -1e9 where masked (NaN-safe).
    sbias = (src_mask.astype(jnp.float32) - 1.0) * 1e9      # (B, Ns)
    tmaskc = tgt_mask.astype(jnp.float32).reshape(B * Nt, 1)

    kernel = functools.partial(
        _one_side_kernel, batch_block=Bb, num_src=Ns, num_tgt=Nt,
        num_head=H, head_dim=hd)

    wspec = lambda arr: pl.BlockSpec(arr.shape, lambda i: (0, 0))

    out2d = pl.pallas_call(
        kernel,
        out_shape=jax.ShapeDtypeStruct((B * Nt, Op), jnp.float32),
        grid=(B // Bb,),
        in_specs=[
            pl.BlockSpec((Bb * Ns, Ds), lambda i: (i, 0)),   # src slab
            pl.BlockSpec((Bb * Nt, Dt), lambda i: (i, 0)),   # tgt slab
            pl.BlockSpec((Bb, Ns), lambda i: (i, 0)),        # src additive bias
            pl.BlockSpec((Bb * Nt, 1), lambda i: (i, 0)),    # tgt mask (column)
            wspec(wkey), wspec(bkey),
            wspec(wval), wspec(bval),
            wspec(wq), wspec(bq),
            wspec(wout_t), wspec(wout_u), wspec(bout_p),
        ],
        out_specs=pl.BlockSpec((Bb * Nt, Op), lambda i: (i, 0)),
        compiler_params=pltpu.CompilerParams(
            dimension_semantics=("parallel",)),
    )(src2d, tgt2d, sbias, tmaskc,
      wkey, bkey, wval, bval, wq, bq, wout_t, wout_u, bout_p)

    return out2d.reshape(B, Nt, Op)[..., :O]


def _reference(src, tgt, src_mask, tgt_mask, params, *, output_size, num_head):
    """Pure-JAX f32 mirror of the PyTorch forward for verification."""
    O, H = output_size, num_head
    hd = O // H
    src_trans = src @ params["wsrc"] + params["bsrc"]
    tgt_trans = tgt @ params["wtgt"] + params["btgt"]
    src_trans = src_trans * src_mask[:, :, None]
    tgt_trans = tgt_trans * tgt_mask[:, :, None]
    src_key, src_val = src_trans[..., :O], src_trans[..., O:]
    tgt_qry = tgt_trans
    outs = []
    for h in range(H):
        k = src_key[..., h * hd:(h + 1) * hd]
        v = src_val[..., h * hd:(h + 1) * hd]
        q = tgt_qry[..., h * hd:(h + 1) * hd]
        s = jnp.einsum("btd,bsd->bts", q, k) / math.sqrt(hd)
        s = jnp.where(src_mask[:, None, :] == 0, -jnp.inf, s)
        p = jax.nn.softmax(s, axis=-1)
        outs.append(jnp.einsum("bts,bsd->btd", p, v))
    tgt_update = jnp.concatenate(outs, axis=-1)
    cat_tgt = jnp.concatenate([tgt, tgt_update], axis=-1)
    return cat_tgt @ params["wout"] + params["bout"]


if __name__ == "__main__":
    # Small shapes consistent with the module's forward.
    B, Ns, Nt = 2, 16, 8
    src_size, tgt_size, output_size, num_head = 32, 32, 32, 4

    key = jax.random.PRNGKey(0)
    ks = jax.random.split(key, 10)

    src = jax.random.normal(ks[0], (B, Ns, src_size), dtype=jnp.float32)
    tgt = jax.random.normal(ks[1], (B, Nt, tgt_size), dtype=jnp.float32)

    # Masks: 1.0 for valid positions, 0.0 for padding (every row has valid pos).
    src_lens = jnp.array([12, 16], dtype=jnp.int32)
    tgt_lens = jnp.array([8, 5], dtype=jnp.int32)
    src_mask = (jnp.arange(Ns)[None, :] < src_lens[:, None]).astype(jnp.float32)
    tgt_mask = (jnp.arange(Nt)[None, :] < tgt_lens[:, None]).astype(jnp.float32)

    # Deterministic "effective" weights (weight_norm(Linear) ≡ affine map;
    # drop=0.0 so FCNet's dropout is a no-op).
    def lin_init(kw, kb, fan_in, fan_out):
        bound = 1.0 / math.sqrt(fan_in)
        w = jax.random.uniform(kw, (fan_in, fan_out), jnp.float32, -bound, bound)
        b = jax.random.uniform(kb, (1, fan_out), jnp.float32, -bound, bound)
        return w, b

    wsrc, bsrc = lin_init(ks[2], ks[3], src_size, output_size * 2)
    wtgt, btgt = lin_init(ks[4], ks[5], tgt_size, output_size)
    wout, bout = lin_init(ks[6], ks[7], output_size + tgt_size, output_size)
    params = dict(wsrc=wsrc, bsrc=bsrc, wtgt=wtgt, btgt=btgt,
                  wout=wout, bout=bout)

    out = one_side_inter_modality_update(
        src, tgt, src_mask, tgt_mask, params,
        output_size=output_size, num_head=num_head)
    out = jax.block_until_ready(out)

    ref = _reference(src, tgt, src_mask, tgt_mask, params,
                     output_size=output_size, num_head=num_head)
    assert out.shape == (B, Nt, output_size)
    # bf16 matmul operands + approx reciprocal => compare with a loose tolerance.
    assert jnp.allclose(out, ref, atol=1e-1, rtol=5e-2), "mismatch vs reference"

    print("KERNEL_OK")
</pallas_src>

<mosaic_0001>
module attributes {stable_mosaic.version = 11 : i64} {
  func.func @_one_side_kernel(%arg0: i32, %arg1: memref<32x32xf32, #tpu.memory_space<vmem>>, %arg2: memref<16x32xf32, #tpu.memory_space<vmem>>, %arg3: memref<2x16xf32, #tpu.memory_space<vmem>>, %arg4: memref<16x1xf32, #tpu.memory_space<vmem>>, %arg5: memref<32x32xbf16, #tpu.memory_space<vmem>>, %arg6: memref<1x32xf32, #tpu.memory_space<vmem>>, %arg7: memref<32x32xbf16, #tpu.memory_space<vmem>>, %arg8: memref<1x32xf32, #tpu.memory_space<vmem>>, %arg9: memref<32x32xbf16, #tpu.memory_space<vmem>>, %arg10: memref<1x32xf32, #tpu.memory_space<vmem>>, %arg11: memref<32x128xbf16, #tpu.memory_space<vmem>>, %arg12: memref<32x128xbf16, #tpu.memory_space<vmem>>, %arg13: memref<1x128xf32, #tpu.memory_space<vmem>>, %arg14: memref<16x128xf32, #tpu.memory_space<vmem>>) attributes {dimension_semantics = [#tpu.dimension_semantics<parallel>], iteration_bounds = array<i64: 1>, scalar_prefetch = 0 : i64, scratch_operands = 0 : i64, tpu.core_type = #tpu.core_type<tc>, window_params = [{transform_indices = @transform_0, window_bounds = array<i64: 32, 32>}, {transform_indices = @transform_1, window_bounds = array<i64: 16, 32>}, {transform_indices = @transform_2, window_bounds = array<i64: 2, 16>}, {transform_indices = @transform_3, window_bounds = array<i64: 16, 1>}, {pipeline_mode = #tpu.pipeline_mode<synchronous>, transform_indices = @transform_4, window_bounds = array<i64: 32, 32>}, {pipeline_mode = #tpu.pipeline_mode<synchronous>, transform_indices = @transform_5, window_bounds = array<i64: 1, 32>}, {pipeline_mode = #tpu.pipeline_mode<synchronous>, transform_indices = @transform_6, window_bounds = array<i64: 32, 32>}, {pipeline_mode = #tpu.pipeline_mode<synchronous>, transform_indices = @transform_7, window_bounds = array<i64: 1, 32>}, {pipeline_mode = #tpu.pipeline_mode<synchronous>, transform_indices = @transform_8, window_bounds = array<i64: 32, 32>}, {pipeline_mode = #tpu.pipeline_mode<synchronous>, transform_indices = @transform_9, window_bounds = array<i64: 1, 32>}, {pipeline_mode = #tpu.pipeline_mode<synchronous>, transform_indices = @transform_10, window_bounds = array<i64: 32, 128>}, {pipeline_mode = #tpu.pipeline_mode<synchronous>, transform_indices = @transform_11, window_bounds = array<i64: 32, 128>}, {pipeline_mode = #tpu.pipeline_mode<synchronous>, transform_indices = @transform_12, window_bounds = array<i64: 1, 128>}, {transform_indices = @transform_13, window_bounds = array<i64: 16, 128>}]} {
    %c0 = arith.constant 0 : index
    %c0_0 = arith.constant 0 : index
    %0 = vector.load %arg1[%c0, %c0_0] : memref<32x32xf32, #tpu.memory_space<vmem>>, vector<32x32xf32>
    %1 = arith.truncf %0 : vector<32x32xf32> to vector<32x32xbf16>
    %c0_1 = arith.constant 0 : index
    %c0_2 = arith.constant 0 : index
    %2 = vector.load %arg2[%c0_1, %c0_2] : memref<16x32xf32, #tpu.memory_space<vmem>>, vector<16x32xf32>
    %3 = arith.truncf %2 : vector<16x32xf32> to vector<16x32xbf16>
    %c0_3 = arith.constant 0 : index
    %c0_4 = arith.constant 0 : index
    %4 = vector.load %arg5[%c0_3, %c0_4] : memref<32x32xbf16, #tpu.memory_space<vmem>>, vector<32x32xbf16>
    %cst = arith.constant dense<0.000000e+00> : vector<32x32xf32>
    %5 = tpu.matmul %1, %4, %cst {dimension_numbers = #tpu.dot_dimension_numbers<[1], [0], [0], [1], [0, 0, 1, 1], [], []>} : vector<32x32xbf16>, vector<32x32xbf16>, vector<32x32xf32> -> vector<32x32xf32>
    %c0_5 = arith.constant 0 : index
    %c0_6 = arith.constant 0 : index
    %6 = vector.load %arg6[%c0_5, %c0_6] : memref<1x32xf32, #tpu.memory_space<vmem>>, vector<1x32xf32>
    %7 = vector.broadcast %6 : vector<1x32xf32> to vector<32x32xf32>
    %8 = arith.addf %5, %7 : vector<32x32xf32>
    %c0_7 = arith.constant 0 : index
    %c0_8 = arith.constant 0 : index
    %9 = vector.load %arg7[%c0_7, %c0_8] : memref<32x32xbf16, #tpu.memory_space<vmem>>, vector<32x32xbf16>
    %cst_9 = arith.constant dense<0.000000e+00> : vector<32x32xf32>
    %10 = tpu.matmul %1, %9, %cst_9 {dimension_numbers = #tpu.dot_dimension_numbers<[1], [0], [0], [1], [0, 0, 1, 1], [], []>} : vector<32x32xbf16>, vector<32x32xbf16>, vector<32x32xf32> -> vector<32x32xf32>
    %c0_10 = arith.constant 0 : index
    %c0_11 = arith.constant 0 : index
    %11 = vector.load %arg8[%c0_10, %c0_11] : memref<1x32xf32, #tpu.memory_space<vmem>>, vector<1x32xf32>
    %12 = vector.broadcast %11 : vector<1x32xf32> to vector<32x32xf32>
    %13 = arith.addf %10, %12 : vector<32x32xf32>
    %c0_12 = arith.constant 0 : index
    %c0_13 = arith.constant 0 : index
    %14 = vector.load %arg9[%c0_12, %c0_13] : memref<32x32xbf16, #tpu.memory_space<vmem>>, vector<32x32xbf16>
    %cst_14 = arith.constant dense<0.000000e+00> : vector<16x32xf32>
    %15 = tpu.matmul %3, %14, %cst_14 {dimension_numbers = #tpu.dot_dimension_numbers<[1], [0], [0], [1], [0, 0, 1, 1], [], []>} : vector<16x32xbf16>, vector<32x32xbf16>, vector<16x32xf32> -> vector<16x32xf32>
    %c0_15 = arith.constant 0 : index
    %c0_16 = arith.constant 0 : index
    %16 = vector.load %arg10[%c0_15, %c0_16] : memref<1x32xf32, #tpu.memory_space<vmem>>, vector<1x32xf32>
    %17 = vector.broadcast %16 : vector<1x32xf32> to vector<16x32xf32>
    %18 = arith.addf %15, %17 : vector<16x32xf32>
    %c0_17 = arith.constant 0 : index
    %c0_18 = arith.constant 0 : index
    %19 = vector.load %arg4[%c0_17, %c0_18] : memref<16x1xf32, #tpu.memory_space<vmem>>, vector<16x1xf32>
    %20 = vector.broadcast %19 : vector<16x1xf32> to vector<16x32xf32>
    %21 = arith.mulf %18, %20 : vector<16x32xf32>
    %c0_19 = arith.constant 0 : index
    %c0_20 = arith.constant 0 : index
    %22 = vector.load %arg11[%c0_19, %c0_20] : memref<32x128xbf16, #tpu.memory_space<vmem>>, vector<32x128xbf16>
    %cst_21 = arith.constant dense<0.000000e+00> : vector<16x128xf32>
    %23 = tpu.matmul %3, %22, %cst_21 {dimension_numbers = #tpu.dot_dimension_numbers<[1], [0], [0], [1], [0, 0, 1, 1], [], []>} : vector<16x32xbf16>, vector<32x128xbf16>, vector<16x128xf32> -> vector<16x128xf32>
    %c0_22 = arith.constant 0 : index
    %c0_23 = arith.constant 0 : index
    %24 = vector.load %arg13[%c0_22, %c0_23] : memref<1x128xf32, #tpu.memory_space<vmem>>, vector<1x128xf32>
    %25 = vector.broadcast %24 : vector<1x128xf32> to vector<16x128xf32>
    %26 = arith.addf %23, %25 : vector<16x128xf32>
    %c0_24 = arith.constant 0 : index
    %c0_25 = arith.constant 0 : index
    %27 = vector.load %arg14[%c0_24, %c0_25] : memref<16x128xf32, #tpu.memory_space<vmem>>, vector<16x128xf32>
    tpu.vector_store %arg14[%c0_24, %c0_25], %26 {strides = array<i32>} : memref<16x128xf32, #tpu.memory_space<vmem>>, vector<16x128xf32>,
    %28 = arith.truncf %8 : vector<32x32xf32> to vector<32x32xbf16>
    %29 = arith.truncf %13 : vector<32x32xf32> to vector<32x32xbf16>
    %30 = arith.truncf %21 : vector<16x32xf32> to vector<16x32xbf16>
    %c0_26 = arith.constant 0 : index
    %c0_27 = arith.constant 0 : index
    %31 = vector.load %arg3[%c0_26, %c0_27] : memref<2x16xf32, #tpu.memory_space<vmem>>, vector<2x16xf32>
    %32 = vector.extract_strided_slice %28 {offsets = [0, 0], sizes = [16, 32], strides = [1, 1]} : vector<32x32xbf16> to vector<16x32xbf16>
    %33 = vector.extract_strided_slice %29 {offsets = [0, 0], sizes = [16, 32], strides = [1, 1]} : vector<32x32xbf16> to vector<16x32xbf16>
    %34 = vector.extract_strided_slice %30 {offsets = [0, 0], sizes = [8, 32], strides = [1, 1]} : vector<16x32xbf16> to vector<8x32xbf16>
    %35 = vector.extract_strided_slice %31 {offsets = [0, 0], sizes = [1, 16], strides = [1, 1]} : vector<2x16xf32> to vector<1x16xf32>
    %36 = vector.extract_strided_slice %34 {offsets = [0, 0], sizes = [8, 8], strides = [1, 1]} : vector<8x32xbf16> to vector<8x8xbf16>
    %37 = vector.extract_strided_slice %32 {offsets = [0, 0], sizes = [16, 8], strides = [1, 1]} : vector<16x32xbf16> to vector<16x8xbf16>
    %38 = vector.extract_strided_slice %33 {offsets = [0, 0], sizes = [16, 8], strides = [1, 1]} : vector<16x32xbf16> to vector<16x8xbf16>
    %cst_28 = arith.constant dense<0.000000e+00> : vector<8x16xf32>
    %39 = tpu.matmul %36, %37, %cst_28 {dimension_numbers = #tpu.dot_dimension_numbers<[1], [1], [0], [0], [0, 0, 1, 0], [], []>} : vector<8x8xbf16>, vector<16x8xbf16>, vector<8x16xf32> -> vector<8x16xf32>
    %40 = vector.broadcast %35 : vector<1x16xf32> to vector<8x16xf32>
    %41 = arith.addf %39, %40 : vector<8x16xf32>
    %cst_29 = arith.constant dense<0xFF800000> : vector<8xf32>
    %42 = vector.multi_reduction <maximumf>, %41, %cst_29 [1] : vector<8x16xf32> to vector<8xf32>
    %43 = vector.shape_cast %42 : vector<8xf32> to vector<8x1xf32>
    %44 = vector.broadcast %43 : vector<8x1xf32> to vector<8x16xf32>
    %45 = arith.subf %41, %44 : vector<8x16xf32>
    %46 = math.exp %45 : vector<8x16xf32>
    %cst_30 = arith.constant dense<0.000000e+00> : vector<8xf32>
    %47 = vector.multi_reduction <add>, %46, %cst_30 [1] : vector<8x16xf32> to vector<8xf32>
    %48 = vector.shape_cast %47 : vector<8xf32> to vector<8x1xf32>
    %49 = tpu.reciprocal %48 {approx = true} : vector<8x1xf32> -> vector<8x1xf32>
    %50 = vector.broadcast %49 : vector<8x1xf32> to vector<8x16xf32>
    %51 = arith.mulf %46, %50 : vector<8x16xf32>
    %52 = arith.truncf %51 : vector<8x16xf32> to vector<8x16xbf16>
    %cst_31 = arith.constant dense<0.000000e+00> : vector<8x8xf32>
    %53 = tpu.matmul %52, %38, %cst_31 {dimension_numbers = #tpu.dot_dimension_numbers<[1], [0], [0], [1], [0, 0, 1, 1], [], []>} : vector<8x16xbf16>, vector<16x8xbf16>, vector<8x8xf32> -> vector<8x8xf32>
    %54 = arith.truncf %53 : vector<8x8xf32> to vector<8x8xbf16>
    %c0_32 = arith.constant 0 : index
    %c0_33 = arith.constant 0 : index
    %55 = vector.load %arg12[%c0_32, %c0_33] : memref<32x128xbf16, #tpu.memory_space<vmem>>, vector<8x128xbf16>
    %cst_34 = arith.constant dense<0.000000e+00> : vector<8x128xf32>
    %56 = tpu.matmul %54, %55, %cst_34 {dimension_numbers = #tpu.dot_dimension_numbers<[1], [0], [0], [1], [0, 0, 1, 1], [], []>} : vector<8x8xbf16>, vector<8x128xbf16>, vector<8x128xf32> -> vector<8x128xf32>
    %57 = vector.extract_strided_slice %34 {offsets = [0, 8], sizes = [8, 8], strides = [1, 1]} : vector<8x32xbf16> to vector<8x8xbf16>
    %58 = vector.extract_strided_slice %32 {offsets = [0, 8], sizes = [16, 8], strides = [1, 1]} : vector<16x32xbf16> to vector<16x8xbf16>
    %59 = vector.extract_strided_slice %33 {offsets = [0, 8], sizes = [16, 8], strides = [1, 1]} : vector<16x32xbf16> to vector<16x8xbf16>
    %cst_35 = arith.constant dense<0.000000e+00> : vector<8x16xf32>
    %60 = tpu.matmul %57, %58, %cst_35 {dimension_numbers = #tpu.dot_dimension_numbers<[1], [1], [0], [0], [0, 0, 1, 0], [], []>} : vector<8x8xbf16>, vector<16x8xbf16>, vector<8x16xf32> -> vector<8x16xf32>
    %61 = vector.broadcast %35 : vector<1x16xf32> to vector<8x16xf32>
    %62 = arith.addf %60, %61 : vector<8x16xf32>
    %cst_36 = arith.constant dense<0xFF800000> : vector<8xf32>
    %63 = vector.multi_reduction <maximumf>, %62, %cst_36 [1] : vector<8x16xf32> to vector<8xf32>
    %64 = vector.shape_cast %63 : vector<8xf32> to vector<8x1xf32>
    %65 = vector.broadcast %64 : vector<8x1xf32> to vector<8x16xf32>
    %66 = arith.subf %62, %65 : vector<8x16xf32>
    %67 = math.exp %66 : vector<8x16xf32>
    %cst_37 = arith.constant dense<0.000000e+00> : vector<8xf32>
    %68 = vector.multi_reduction <add>, %67, %cst_37 [1] : vector<8x16xf32> to vector<8xf32>
    %69 = vector.shape_cast %68 : vector<8xf32> to vector<8x1xf32>
    %70 = tpu.reciprocal %69 {approx = true} : vector<8x1xf32> -> vector<8x1xf32>
    %71 = vector.broadcast %70 : vector<8x1xf32> to vector<8x16xf32>
    %72 = arith.mulf %67, %71 : vector<8x16xf32>
    %73 = arith.truncf %72 : vector<8x16xf32> to vector<8x16xbf16>
    %cst_38 = arith.constant dense<0.000000e+00> : vector<8x8xf32>
    %74 = tpu.matmul %73, %59, %cst_38 {dimension_numbers = #tpu.dot_dimension_numbers<[1], [0], [0], [1], [0, 0, 1, 1], [], []>} : vector<8x16xbf16>, vector<16x8xbf16>, vector<8x8xf32> -> vector<8x8xf32>
    %75 = arith.truncf %74 : vector<8x8xf32> to vector<8x8xbf16>
    %c8 = arith.constant 8 : index
    %c0_39 = arith.constant 0 : index
    %76 = vector.load %arg12[%c8, %c0_39] : memref<32x128xbf16, #tpu.memory_space<vmem>>, vector<8x128xbf16>
    %cst_40 = arith.constant dense<0.000000e+00> : vector<8x128xf32>
    %77 = tpu.matmul %75, %76, %cst_40 {dimension_numbers = #tpu.dot_dimension_numbers<[1], [0], [0], [1], [0, 0, 1, 1], [], []>} : vector<8x8xbf16>, vector<8x128xbf16>, vector<8x128xf32> -> vector<8x128xf32>
    %78 = arith.addf %56, %77 : vector<8x128xf32>
    %79 = vector.extract_strided_slice %34 {offsets = [0, 16], sizes = [8, 8], strides = [1, 1]} : vector<8x32xbf16> to vector<8x8xbf16>
    %80 = vector.extract_strided_slice %32 {offsets = [0, 16], sizes = [16, 8], strides = [1, 1]} : vector<16x32xbf16> to vector<16x8xbf16>
    %81 = vector.extract_strided_slice %33 {offsets = [0, 16], sizes = [16, 8], strides = [1, 1]} : vector<16x32xbf16> to vector<16x8xbf16>
    %cst_41 = arith.constant dense<0.000000e+00> : vector<8x16xf32>
    %82 = tpu.matmul %79, %80, %cst_41 {dimension_numbers = #tpu.dot_dimension_numbers<[1], [1], [0], [0], [0, 0, 1, 0], [], []>} : vector<8x8xbf16>, vector<16x8xbf16>, vector<8x16xf32> -> vector<8x16xf32>
    %83 = vector.broadcast %35 : vector<1x16xf32> to vector<8x16xf32>
    %84 = arith.addf %82, %83 : vector<8x16xf32>
    %cst_42 = arith.constant dense<0xFF800000> : vector<8xf32>
    %85 = vector.multi_reduction <maximumf>, %84, %cst_42 [1] : vector<8x16xf32> to vector<8xf32>
    %86 = vector.shape_cast %85 : vector<8xf32> to vector<8x1xf32>
    %87 = vector.broadcast %86 : vector<8x1xf32> to vector<8x16xf32>
    %88 = arith.subf %84, %87 : vector<8x16xf32>
    %89 = math.exp %88 : vector<8x16xf32>
    %cst_43 = arith.constant dense<0.000000e+00> : vector<8xf32>
    %90 = vector.multi_reduction <add>, %89, %cst_43 [1] : vector<8x16xf32> to vector<8xf32>
    %91 = vector.shape_cast %90 : vector<8xf32> to vector<8x1xf32>
    %92 = tpu.reciprocal %91 {approx = true} : vector<8x1xf32> -> vector<8x1xf32>
    %93 = vector.broadcast %92 : vector<8x1xf32> to vector<8x16xf32>
    %94 = arith.mulf %89, %93 : vector<8x16xf32>
    %95 = arith.truncf %94 : vector<8x16xf32> to vector<8x16xbf16>
    %cst_44 = arith.constant dense<0.000000e+00> : vector<8x8xf32>
    %96 = tpu.matmul %95, %81, %cst_44 {dimension_numbers = #tpu.dot_dimension_numbers<[1], [0], [0], [1], [0, 0, 1, 1], [], []>} : vector<8x16xbf16>, vector<16x8xbf16>, vector<8x8xf32> -> vector<8x8xf32>
    %97 = arith.truncf %96 : vector<8x8xf32> to vector<8x8xbf16>
    %c16 = arith.constant 16 : index
    %c0_45 = arith.constant 0 : index
    %98 = vector.load %arg12[%c16, %c0_45] : memref<32x128xbf16, #tpu.memory_space<vmem>>, vector<8x128xbf16>
    %cst_46 = arith.constant dense<0.000000e+00> : vector<8x128xf32>
    %99 = tpu.matmul %97, %98, %cst_46 {dimension_numbers = #tpu.dot_dimension_numbers<[1], [0], [0], [1], [0, 0, 1, 1], [], []>} : vector<8x8xbf16>, vector<8x128xbf16>, vector<8x128xf32> -> vector<8x128xf32>
    %100 = arith.addf %78, %99 : vector<8x128xf32>
    %101 = vector.extract_strided_slice %34 {offsets = [0, 24], sizes = [8, 8], strides = [1, 1]} : vector<8x32xbf16> to vector<8x8xbf16>
    %102 = vector.extract_strided_slice %32 {offsets = [0, 24], sizes = [16, 8], strides = [1, 1]} : vector<16x32xbf16> to vector<16x8xbf16>
    %103 = vector.extract_strided_slice %33 {offsets = [0, 24], sizes = [16, 8], strides = [1, 1]} : vector<16x32xbf16> to vector<16x8xbf16>
    %cst_47 = arith.constant dense<0.000000e+00> : vector<8x16xf32>
    %104 = tpu.matmul %101, %102, %cst_47 {dimension_numbers = #tpu.dot_dimension_numbers<[1], [1], [0], [0], [0, 0, 1, 0], [], []>} : vector<8x8xbf16>, vector<16x8xbf16>, vector<8x16xf32> -> vector<8x16xf32>
    %105 = vector.broadcast %35 : vector<1x16xf32> to vector<8x16xf32>
    %106 = arith.addf %104, %105 : vector<8x16xf32>
    %cst_48 = arith.constant dense<0xFF800000> : vector<8xf32>
    %107 = vector.multi_reduction <maximumf>, %106, %cst_48 [1] : vector<8x16xf32> to vector<8xf32>
    %108 = vector.shape_cast %107 : vector<8xf32> to vector<8x1xf32>
    %109 = vector.broadcast %108 : vector<8x1xf32> to vector<8x16xf32>
    %110 = arith.subf %106, %109 : vector<8x16xf32>
    %111 = math.exp %110 : vector<8x16xf32>
    %cst_49 = arith.constant dense<0.000000e+00> : vector<8xf32>
    %112 = vector.multi_reduction <add>, %111, %cst_49 [1] : vector<8x16xf32> to vector<8xf32>
    %113 = vector.shape_cast %112 : vector<8xf32> to vector<8x1xf32>
    %114 = tpu.reciprocal %113 {approx = true} : vector<8x1xf32> -> vector<8x1xf32>
    %115 = vector.broadcast %114 : vector<8x1xf32> to vector<8x16xf32>
    %116 = arith.mulf %111, %115 : vector<8x16xf32>
    %117 = arith.truncf %116 : vector<8x16xf32> to vector<8x16xbf16>
    %cst_50 = arith.constant dense<0.000000e+00> : vector<8x8xf32>
    %118 = tpu.matmul %117, %103, %cst_50 {dimension_numbers = #tpu.dot_dimension_numbers<[1], [0], [0], [1], [0, 0, 1, 1], [], []>} : vector<8x16xbf16>, vector<16x8xbf16>, vector<8x8xf32> -> vector<8x8xf32>
    %119 = arith.truncf %118 : vector<8x8xf32> to vector<8x8xbf16>
    %c24 = arith.constant 24 : index
    %c0_51 = arith.constant 0 : index
    %120 = vector.load %arg12[%c24, %c0_51] : memref<32x128xbf16, #tpu.memory_space<vmem>>, vector<8x128xbf16>
    %cst_52 = arith.constant dense<0.000000e+00> : vector<8x128xf32>
    %121 = tpu.matmul %119, %120, %cst_52 {dimension_numbers = #tpu.dot_dimension_numbers<[1], [0], [0], [1], [0, 0, 1, 1], [], []>} : vector<8x8xbf16>, vector<8x128xbf16>, vector<8x128xf32> -> vector<8x128xf32>
    %122 = arith.addf %100, %121 : vector<8x128xf32>
    %c0_53 = arith.constant 0 : index
    %c0_54 = arith.constant 0 : index
    %123 = vector.load %arg14[%c0_53, %c0_54] : memref<16x128xf32, #tpu.memory_space<vmem>>, vector<8x128xf32>
    %124 = arith.addf %123, %122 : vector<8x128xf32>
    %c0_55 = arith.constant 0 : index
    %c0_56 = arith.constant 0 : index
    %125 = vector.load %arg14[%c0_55, %c0_56] : memref<16x128xf32, #tpu.memory_space<vmem>>, vector<8x128xf32>
    tpu.vector_store %arg14[%c0_55, %c0_56], %124 {strides = array<i32>} : memref<16x128xf32, #tpu.memory_space<vmem>>, vector<8x128xf32>,
    %126 = vector.extract_strided_slice %28 {offsets = [16, 0], sizes = [16, 32], strides = [1, 1]} : vector<32x32xbf16> to vector<16x32xbf16>
    %127 = vector.extract_strided_slice %29 {offsets = [16, 0], sizes = [16, 32], strides = [1, 1]} : vector<32x32xbf16> to vector<16x32xbf16>
    %128 = vector.extract_strided_slice %30 {offsets = [8, 0], sizes = [8, 32], strides = [1, 1]} : vector<16x32xbf16> to vector<8x32xbf16>
    %129 = vector.extract_strided_slice %31 {offsets = [1, 0], sizes = [1, 16], strides = [1, 1]} : vector<2x16xf32> to vector<1x16xf32>
    %130 = vector.extract_strided_slice %128 {offsets = [0, 0], sizes = [8, 8], strides = [1, 1]} : vector<8x32xbf16> to vector<8x8xbf16>
    %131 = vector.extract_strided_slice %126 {offsets = [0, 0], sizes = [16, 8], strides = [1, 1]} : vector<16x32xbf16> to vector<16x8xbf16>
    %132 = vector.extract_strided_slice %127 {offsets = [0, 0], sizes = [16, 8], strides = [1, 1]} : vector<16x32xbf16> to vector<16x8xbf16>
    %cst_57 = arith.constant dense<0.000000e+00> : vector<8x16xf32>
    %133 = tpu.matmul %130, %131, %cst_57 {dimension_numbers = #tpu.dot_dimension_numbers<[1], [1], [0], [0], [0, 0, 1, 0], [], []>} : vector<8x8xbf16>, vector<16x8xbf16>, vector<8x16xf32> -> vector<8x16xf32>
    %134 = vector.broadcast %129 : vector<1x16xf32> to vector<8x16xf32>
    %135 = arith.addf %133, %134 : vector<8x16xf32>
    %cst_58 = arith.constant dense<0xFF800000> : vector<8xf32>
    %136 = vector.multi_reduction <maximumf>, %135, %cst_58 [1] : vector<8x16xf32> to vector<8xf32>
    %137 = vector.shape_cast %136 : vector<8xf32> to vector<8x1xf32>
    %138 = vector.broadcast %137 : vector<8x1xf32> to vector<8x16xf32>
    %139 = arith.subf %135, %138 : vector<8x16xf32>
    %140 = math.exp %139 : vector<8x16xf32>
    %cst_59 = arith.constant dense<0.000000e+00> : vector<8xf32>
    %141 = vector.multi_reduction <add>, %140, %cst_59 [1] : vector<8x16xf32> to vector<8xf32>
    %142 = vector.shape_cast %141 : vector<8xf32> to vector<8x1xf32>
    %143 = tpu.reciprocal %142 {approx = true} : vector<8x1xf32> -> vector<8x1xf32>
    %144 = vector.broadcast %143 : vector<8x1xf32> to vector<8x16xf32>
    %145 = arith.mulf %140, %144 : vector<8x16xf32>
    %146 = arith.truncf %145 : vector<8x16xf32> to vector<8x16xbf16>
    %cst_60 = arith.constant dense<0.000000e+00> : vector<8x8xf32>
    %147 = tpu.matmul %146, %132, %cst_60 {dimension_numbers = #tpu.dot_dimension_numbers<[1], [0], [0], [1], [0, 0, 1, 1], [], []>} : vector<8x16xbf16>, vector<16x8xbf16>, vector<8x8xf32> -> vector<8x8xf32>
    %148 = arith.truncf %147 : vector<8x8xf32> to vector<8x8xbf16>
    %c0_61 = arith.constant 0 : index
    %c0_62 = arith.constant 0 : index
    %149 = vector.load %arg12[%c0_61, %c0_62] : memref<32x128xbf16, #tpu.memory_space<vmem>>, vector<8x128xbf16>
    %cst_63 = arith.constant dense<0.000000e+00> : vector<8x128xf32>
    %150 = tpu.matmul %148, %149, %cst_63 {dimension_numbers = #tpu.dot_dimension_numbers<[1], [0], [0], [1], [0, 0, 1, 1], [], []>} : vector<8x8xbf16>, vector<8x128xbf16>, vector<8x128xf32> -> vector<8x128xf32>
    %151 = vector.extract_strided_slice %128 {offsets = [0, 8], sizes = [8, 8], strides = [1, 1]} : vector<8x32xbf16> to vector<8x8xbf16>
    %152 = vector.extract_strided_slice %126 {offsets = [0, 8], sizes = [16, 8], strides = [1, 1]} : vector<16x32xbf16> to vector<16x8xbf16>
    %153 = vector.extract_strided_slice %127 {offsets = [0, 8], sizes = [16, 8], strides = [1, 1]} : vector<16x32xbf16> to vector<16x8xbf16>
    %cst_64 = arith.constant dense<0.000000e+00> : vector<8x16xf32>
    %154 = tpu.matmul %151, %152, %cst_64 {dimension_numbers = #tpu.dot_dimension_numbers<[1], [1], [0], [0], [0, 0, 1, 0], [], []>} : vector<8x8xbf16>, vector<16x8xbf16>, vector<8x16xf32> -> vector<8x16xf32>
    %155 = vector.broadcast %129 : vector<1x16xf32> to vector<8x16xf32>
    %156 = arith.addf %154, %155 : vector<8x16xf32>
    %cst_65 = arith.constant dense<0xFF800000> : vector<8xf32>
    %157 = vector.multi_reduction <maximumf>, %156, %cst_65 [1] : vector<8x16xf32> to vector<8xf32>
    %158 = vector.shape_cast %157 : vector<8xf32> to vector<8x1xf32>
    %159 = vector.broadcast %158 : vector<8x1xf32> to vector<8x16xf32>
    %160 = arith.subf %156, %159 : vector<8x16xf32>
    %161 = math.exp %160 : vector<8x16xf32>
    %cst_66 = arith.constant dense<0.000000e+00> : vector<8xf32>
    %162 = vector.multi_reduction <add>, %161, %cst_66 [1] : vector<8x16xf32> to vector<8xf32>
    %163 = vector.shape_cast %162 : vector<8xf32> to vector<8x1xf32>
    %164 = tpu.reciprocal %163 {approx = true} : vector<8x1xf32> -> vector<8x1xf32>
    %165 = vector.broadcast %164 : vector<8x1xf32> to vector<8x16xf32>
    %166 = arith.mulf %161, %165 : vector<8x16xf32>
    %167 = arith.truncf %166 : vector<8x16xf32> to vector<8x16xbf16>
    %cst_67 = arith.constant dense<0.000000e+00> : vector<8x8xf32>
    %168 = tpu.matmul %167, %153, %cst_67 {dimension_numbers = #tpu.dot_dimension_numbers<[1], [0], [0], [1], [0, 0, 1, 1], [], []>} : vector<8x16xbf16>, vector<16x8xbf16>, vector<8x8xf32> -> vector<8x8xf32>
    %169 = arith.truncf %168 : vector<8x8xf32> to vector<8x8xbf16>
    %c8_68 = arith.constant 8 : index
    %c0_69 = arith.constant 0 : index
    %170 = vector.load %arg12[%c8_68, %c0_69] : memref<32x128xbf16, #tpu.memory_space<vmem>>, vector<8x128xbf16>
    %cst_70 = arith.constant dense<0.000000e+00> : vector<8x128xf32>
    %171 = tpu.matmul %169, %170, %cst_70 {dimension_numbers = #tpu.dot_dimension_numbers<[1], [0], [0], [1], [0, 0, 1, 1], [], []>} : vector<8x8xbf16>, vector<8x128xbf16>, vector<8x128xf32> -> vector<8x128xf32>
    %172 = arith.addf %150, %171 : vector<8x128xf32>
    %173 = vector.extract_strided_slice %128 {offsets = [0, 16], sizes = [8, 8], strides = [1, 1]} : vector<8x32xbf16> to vector<8x8xbf16>
    %174 = vector.extract_strided_slice %126 {offsets = [0, 16], sizes = [16, 8], strides = [1, 1]} : vector<16x32xbf16> to vector<16x8xbf16>
    %175 = vector.extract_strided_slice %127 {offsets = [0, 16], sizes = [16, 8], strides = [1, 1]} : vector<16x32xbf16> to vector<16x8xbf16>
    %cst_71 = arith.constant dense<0.000000e+00> : vector<8x16xf32>
    %176 = tpu.matmul %173, %174, %cst_71 {dimension_numbers = #tpu.dot_dimension_numbers<[1], [1], [0], [0], [0, 0, 1, 0], [], []>} : vector<8x8xbf16>, vector<16x8xbf16>, vector<8x16xf32> -> vector<8x16xf32>
    %177 = vector.broadcast %129 : vector<1x16xf32> to vector<8x16xf32>
    %178 = arith.addf %176, %177 : vector<8x16xf32>
    %cst_72 = arith.constant dense<0xFF800000> : vector<8xf32>
    %179 = vector.multi_reduction <maximumf>, %178, %cst_72 [1] : vector<8x16xf32> to vector<8xf32>
    %180 = vector.shape_cast %179 : vector<8xf32> to vector<8x1xf32>
    %181 = vector.broadcast %180 : vector<8x1xf32> to vector<8x16xf32>
    %182 = arith.subf %178, %181 : vector<8x16xf32>
    %183 = math.exp %182 : vector<8x16xf32>
    %cst_73 = arith.constant dense<0.000000e+00> : vector<8xf32>
    %184 = vector.multi_reduction <add>, %183, %cst_73 [1] : vector<8x16xf32> to vector<8xf32>
    %185 = vector.shape_cast %184 : vector<8xf32> to vector<8x1xf32>
    %186 = tpu.reciprocal %185 {approx = true} : vector<8x1xf32> -> vector<8x1xf32>
    %187 = vector.broadcast %186 : vector<8x1xf32> to vector<8x16xf32>
    %188 = arith.mulf %183, %187 : vector<8x16xf32>
    %189 = arith.truncf %188 : vector<8x16xf32> to vector<8x16xbf16>
    %cst_74 = arith.constant dense<0.000000e+00> : vector<8x8xf32>
    %190 = tpu.matmul %189, %175, %cst_74 {dimension_numbers = #tpu.dot_dimension_numbers<[1], [0], [0], [1], [0, 0, 1, 1], [], []>} : vector<8x16xbf16>, vector<16x8xbf16>, vector<8x8xf32> -> vector<8x8xf32>
    %191 = arith.truncf %190 : vector<8x8xf32> to vector<8x8xbf16>
    %c16_75 = arith.constant 16 : index
    %c0_76 = arith.constant 0 : index
    %192 = vector.load %arg12[%c16_75, %c0_76] : memref<32x128xbf16, #tpu.memory_space<vmem>>, vector<8x128xbf16>
    %cst_77 = arith.constant dense<0.000000e+00> : vector<8x128xf32>
    %193 = tpu.matmul %191, %192, %cst_77 {dimension_numbers = #tpu.dot_dimension_numbers<[1], [0], [0], [1], [0, 0, 1, 1], [], []>} : vector<8x8xbf16>, vector<8x128xbf16>, vector<8x128xf32> -> vector<8x128xf32>
    %194 = arith.addf %172, %193 : vector<8x128xf32>
    %195 = vector.extract_strided_slice %128 {offsets = [0, 24], sizes = [8, 8], strides = [1, 1]} : vector<8x32xbf16> to vector<8x8xbf16>
    %196 = vector.extract_strided_slice %126 {offsets = [0, 24], sizes = [16, 8], strides = [1, 1]} : vector<16x32xbf16> to vector<16x8xbf16>
    %197 = vector.extract_strided_slice %127 {offsets = [0, 24], sizes = [16, 8], strides = [1, 1]} : vector<16x32xbf16> to vector<16x8xbf16>
    %cst_78 = arith.constant dense<0.000000e+00> : vector<8x16xf32>
    %198 = tpu.matmul %195, %196, %cst_78 {dimension_numbers = #tpu.dot_dimension_numbers<[1], [1], [0], [0], [0, 0, 1, 0], [], []>} : vector<8x8xbf16>, vector<16x8xbf16>, vector<8x16xf32> -> vector<8x16xf32>
    %199 = vector.broadcast %129 : vector<1x16xf32> to vector<8x16xf32>
    %200 = arith.addf %198, %199 : vector<8x16xf32>
    %cst_79 = arith.constant dense<0xFF800000> : vector<8xf32>
    %201 = vector.multi_reduction <maximumf>, %200, %cst_79 [1] : vector<8x16xf32> to vector<8xf32>
    %202 = vector.shape_cast %201 : vector<8xf32> to vector<8x1xf32>
    %203 = vector.broadcast %202 : vector<8x1xf32> to vector<8x16xf32>
    %204 = arith.subf %200, %203 : vector<8x16xf32>
    %205 = math.exp %204 : vector<8x16xf32>
    %cst_80 = arith.constant dense<0.000000e+00> : vector<8xf32>
    %206 = vector.multi_reduction <add>, %205, %cst_80 [1] : vector<8x16xf32> to vector<8xf32>
    %207 = vector.shape_cast %206 : vector<8xf32> to vector<8x1xf32>
    %208 = tpu.reciprocal %207 {approx = true} : vector<8x1xf32> -> vector<8x1xf32>
    %209 = vector.broadcast %208 : vector<8x1xf32> to vector<8x16xf32>
    %210 = arith.mulf %205, %209 : vector<8x16xf32>
    %211 = arith.truncf %210 : vector<8x16xf32> to vector<8x16xbf16>
    %cst_81 = arith.constant dense<0.000000e+00> : vector<8x8xf32>
    %212 = tpu.matmul %211, %197, %cst_81 {dimension_numbers = #tpu.dot_dimension_numbers<[1], [0], [0], [1], [0, 0, 1, 1], [], []>} : vector<8x16xbf16>, vector<16x8xbf16>, vector<8x8xf32> -> vector<8x8xf32>
    %213 = arith.truncf %212 : vector<8x8xf32> to vector<8x8xbf16>
    %c24_82 = arith.constant 24 : index
    %c0_83 = arith.constant 0 : index
    %214 = vector.load %arg12[%c24_82, %c0_83] : memref<32x128xbf16, #tpu.memory_space<vmem>>, vector<8x128xbf16>
    %cst_84 = arith.constant dense<0.000000e+00> : vector<8x128xf32>
    %215 = tpu.matmul %213, %214, %cst_84 {dimension_numbers = #tpu.dot_dimension_numbers<[1], [0], [0], [1], [0, 0, 1, 1], [], []>} : vector<8x8xbf16>, vector<8x128xbf16>, vector<8x128xf32> -> vector<8x128xf32>
    %216 = arith.addf %194, %215 : vector<8x128xf32>
    %c8_85 = arith.constant 8 : index
    %c0_86 = arith.constant 0 : index
    %217 = vector.load %arg14[%c8_85, %c0_86] : memref<16x128xf32, #tpu.memory_space<vmem>>, vector<8x128xf32>
    %218 = arith.addf %217, %216 : vector<8x128xf32>
    %c8_87 = arith.constant 8 : index
    %c0_88 = arith.constant 0 : index
    %219 = vector.load %arg14[%c8_87, %c0_88] : memref<16x128xf32, #tpu.memory_space<vmem>>, vector<8x128xf32>
    tpu.vector_store %arg14[%c8_87, %c0_88], %218 {strides = array<i32>} : memref<16x128xf32, #tpu.memory_space<vmem>>, vector<8x128xf32>,
    return
  }
  func.func @transform_0(%arg0: i32) -> (i32, i32) {
    %c0_i32 = arith.constant 0 : i32
    %c0_i32_0 = arith.constant 0 : i32
    return %arg0, %c0_i32 : i32, i32
  }
  func.func @transform_1(%arg0: i32) -> (i32, i32) {
    %c0_i32 = arith.constant 0 : i32
    %c0_i32_0 = arith.constant 0 : i32
    return %arg0, %c0_i32 : i32, i32
  }
  func.func @transform_2(%arg0: i32) -> (i32, i32) {
    %c0_i32 = arith.constant 0 : i32
    %c0_i32_0 = arith.constant 0 : i32
    return %arg0, %c0_i32 : i32, i32
  }
  func.func @transform_3(%arg0: i32) -> (i32, i32) {
    %c0_i32 = arith.constant 0 : i32
    %c0_i32_0 = arith.constant 0 : i32
    return %arg0, %c0_i32 : i32, i32
  }
  func.func @transform_4(%arg0: i32) -> (i32, i32) {
    %c0_i32 = arith.constant 0 : i32
    %c0_i32_0 = arith.constant 0 : i32
    %c0_i32_1 = arith.constant 0 : i32
    return %c0_i32, %c0_i32_0 : i32, i32
  }
  func.func @transform_5(%arg0: i32) -> (i32, i32) {
    %c0_i32 = arith.constant 0 : i32
    %c0_i32_0 = arith.constant 0 : i32
    %c0_i32_1 = arith.constant 0 : i32
    return %c0_i32, %c0_i32_0 : i32, i32
  }
  func.func @transform_6(%arg0: i32) -> (i32, i32) {
    %c0_i32 = arith.constant 0 : i32
    %c0_i32_0 = arith.constant 0 : i32
    %c0_i32_1 = arith.constant 0 : i32
    return %c0_i32, %c0_i32_0 : i32, i32
  }
  func.func @transform_7(%arg0: i32) -> (i32, i32) {
    %c0_i32 = arith.constant 0 : i32
    %c0_i32_0 = arith.constant 0 : i32
    %c0_i32_1 = arith.constant 0 : i32
    return %c0_i32, %c0_i32_0 : i32, i32
  }
  func.func @transform_8(%arg0: i32) -> (i32, i32) {
    %c0_i32 = arith.constant 0 : i32
    %c0_i32_0 = arith.constant 0 : i32
    %c0_i32_1 = arith.constant 0 : i32
    return %c0_i32, %c0_i32_0 : i32, i32
  }
  func.func @transform_9(%arg0: i32) -> (i32, i32) {
    %c0_i32 = arith.constant 0 : i32
    %c0_i32_0 = arith.constant 0 : i32
    %c0_i32_1 = arith.constant 0 : i32
    return %c0_i32, %c0_i32_0 : i32, i32
  }
  func.func @transform_10(%arg0: i32) -> (i32, i32) {
    %c0_i32 = arith.constant 0 : i32
    %c0_i32_0 = arith.constant 0 : i32
    %c0_i32_1 = arith.constant 0 : i32
    return %c0_i32, %c0_i32_0 : i32, i32
  }
  func.func @transform_11(%arg0: i32) -> (i32, i32) {
    %c0_i32 = arith.constant 0 : i32
    %c0_i32_0 = arith.constant 0 : i32
    %c0_i32_1 = arith.constant 0 : i32
    return %c0_i32, %c0_i32_0 : i32, i32
  }
  func.func @transform_12(%arg0: i32) -> (i32, i32) {
    %c0_i32 = arith.constant 0 : i32
    %c0_i32_0 = arith.constant 0 : i32
    %c0_i32_1 = arith.constant 0 : i32
    return %c0_i32, %c0_i32_0 : i32, i32
  }
  func.func @transform_13(%arg0: i32) -> (i32, i32) {
    %c0_i32 = arith.constant 0 : i32
    %c0_i32_0 = arith.constant 0 : i32
    return %arg0, %c0_i32 : i32, i32
  }
}

</mosaic_0001>

<llo_original>
// kernel: tpu_custom_call.1
$region0: #{tpu_custom_call.1}
  #allocation0 [shape = 'u32[]', space=smem, size = 0x4, offset = 0x4, fixed_abs, tag = 'smem constant byte address 0x4 - core index']
  #allocation1 [shape = 'u32[144,128]{1,0:T(1,128)}', space=vmem, size = 0x12000, scoped, tag = 'internal scratch']
  %s0 = inlined_call_operand.hbm [shape: f32[32,32], index: 0, kind: input, shape index: {}]
  %s1 = inlined_call_operand.vmem [shape: f32[16,32], index: 1, kind: input, shape index: {}]
  %s2 = inlined_call_operand.hbm [shape: f32[2,16], index: 2, kind: input, shape index: {}]
  %s3 = inlined_call_operand.vmem [shape: f32[16,1], index: 3, kind: input, shape index: {}]
  %s4 = inlined_call_operand.vmem [shape: bf16[32,32], index: 4, kind: input, shape index: {}]
  %s5 = inlined_call_operand.vmem [shape: f32[1,32], index: 5, kind: input, shape index: {}]
  %s6 = inlined_call_operand.hbm [shape: bf16[32,32], index: 6, kind: input, shape index: {}]
  %s7 = inlined_call_operand.vmem [shape: f32[1,32], index: 7, kind: input, shape index: {}]
  %s8 = inlined_call_operand.hbm [shape: bf16[32,32], index: 8, kind: input, shape index: {}]
  %s9 = inlined_call_operand.vmem [shape: f32[1,32], index: 9, kind: input, shape index: {}]
  %s10 = inlined_call_operand.vmem [shape: bf16[32,128], index: 10, kind: input, shape index: {}]
  %s11 = inlined_call_operand.hbm [shape: bf16[32,128], index: 11, kind: input, shape index: {}]
  %s12 = inlined_call_operand.vmem [shape: f32[1,128], index: 12, kind: input, shape index: {}]
  %s13 = inlined_call_operand.hbm [shape: f32[16,128], index: 13, kind: output, shape index: {}]
  %s14 = sld [smem:[#allocation0]]
  $region82: #{tpu_custom_call.1} parent=0
    _
  %s16 = ssub.s32 1, %s14
  %s17 = scalar_select 0, %s16, %s14
  $region1: #{tpu_custom_call.1} parent=0
    #allocation2 [shape = 'u8[16384]{0}', space=vmem, size = 0x4000, scoped, tag = 'input window, operand 0, single buffered']
    #allocation3 [shape = 's32[1]{0}', space=sflag, size = 0x4, scoped, tag = 'scoped memory for tpu_custom_call.1']
    #allocation4 [shape = 's32[1]{0}', space=sflag, size = 0x4, scoped, tag = 'scoped memory for tpu_custom_call.1']
    #allocation5 [shape = 'u8[1024]{0}', space=vmem, size = 0x400, scoped, tag = 'input window, operand 2, single buffered']
    #allocation6 [shape = 's32[1]{0}', space=sflag, size = 0x4, scoped, tag = 'scoped memory for tpu_custom_call.1']
    #allocation7 [shape = 'u8[8192]{0}', space=vmem, size = 0x2000, scoped, tag = 'input window, operand 6, single buffered']
    #allocation8 [shape = 'u8[8192]{0}', space=vmem, size = 0x2000, scoped, tag = 'input window, operand 8, single buffered']
    #allocation9 [shape = 's32[1]{0}', space=sflag, size = 0x4, scoped, tag = 'scoped memory for tpu_custom_call.1']
    #allocation10 [shape = 'u8[8192]{0}', space=vmem, size = 0x2000, scoped, tag = 'input window, operand 11, single buffered']
    #allocation11 [shape = 'u8[8192]{0}', space=vmem, size = 0x2000, scoped, tag = 'output window, operand 0, single buffered']
    %18 = vsyncpa [#allocation3], 0
    %19 = vsyncpa [#allocation6], 0
    %20 = vsyncpa [#allocation9], 0
    %21 = vsyncpa [#allocation4], 0
    // Predicated region
    $region2: #{tpu_custom_call.1} parent=1 // pred_check
      _
    $region3: #{tpu_custom_call.1} parent=1 // pred_check_branch
      %23 = sbr.rel (0) target = $region5
    $region4: #{tpu_custom_call.1} parent=1 // pred_region
      %s25 = ssub.s32 512, 512
      %26 = vsyncadd [#allocation3], %s25
      %s27 = sshll.u32 [#allocation2], 4
      %s28 = int_to_ptr.vmem [resolvable:$true] %s27
      %33 = dma.hbm_to_vmem [thread:$0]  %s0, 512, %s28, [#allocation3], 128, 128, 8
    $region5: #{tpu_custom_call.1} parent=1 // pred_fallthru
      _
    // Predicated region
    $region6: #{tpu_custom_call.1} parent=1 // pred_check
      _
    $region7: #{tpu_custom_call.1} parent=1 // pred_check_branch
      %35 = sbr.rel (0) target = $region9
    $region8: #{tpu_custom_call.1} parent=1 // pred_region
      _
    $region9: #{tpu_custom_call.1} parent=1 // pred_fallthru
      _
    // Predicated region
    $region10: #{tpu_custom_call.1} parent=1 // pred_check
      _
    $region11: #{tpu_custom_call.1} parent=1 // pred_check_branch
      %37 = sbr.rel (0) target = $region13
    $region12: #{tpu_custom_call.1} parent=1 // pred_region
      %s39 = ssub.s32 32, 32
      %40 = vsyncadd [#allocation6], %s39
      %s42 = sshll.u32 [#allocation5], 4
      %s43 = int_to_ptr.vmem [resolvable:$true] %s42
      %45 = dma.hbm_to_vmem [thread:$0]  %s2, 32, %s43, [#allocation6]
    $region13: #{tpu_custom_call.1} parent=1 // pred_fallthru
      _
    // Predicated region
    $region14: #{tpu_custom_call.1} parent=1 // pred_check
      _
    $region15: #{tpu_custom_call.1} parent=1 // pred_check_branch
      %47 = sbr.rel (0) target = $region17
    $region16: #{tpu_custom_call.1} parent=1 // pred_region
      _
    $region17: #{tpu_custom_call.1} parent=1 // pred_fallthru
      _
    // Predicated region
    $region18: #{tpu_custom_call.1} parent=1 // pred_check
      _
    $region19: #{tpu_custom_call.1} parent=1 // pred_check_branch
      %49 = sbr.rel (0) target = $region21
    $region20: #{tpu_custom_call.1} parent=1 // pred_region
      _
    $region21: #{tpu_custom_call.1} parent=1 // pred_fallthru
      _
    // Predicated region
    $region22: #{tpu_custom_call.1} parent=1 // pred_check
      _
    $region23: #{tpu_custom_call.1} parent=1 // pred_check_branch
      %51 = sbr.rel (0) target = $region25
    $region24: #{tpu_custom_call.1} parent=1 // pred_region
      _
    $region25: #{tpu_custom_call.1} parent=1 // pred_fallthru
      _
    // Predicated region
    $region26: #{tpu_custom_call.1} parent=1 // pred_check
      _
    $region27: #{tpu_custom_call.1} parent=1 // pred_check_branch
      %53 = sbr.rel (0) target = $region29
    $region28: #{tpu_custom_call.1} parent=1 // pred_region
      %s55 = ssub.s32 256, 256
      %56 = vsyncadd [#allocation6], %s55
      %s57 = sshll.u32 [#allocation7], 4
      %s58 = int_to_ptr.vmem [resolvable:$true] %s57
      %63 = dma.hbm_to_vmem [thread:$0]  %s6, 256, %s58, [#allocation6], 64, 64, 4
    $region29: #{tpu_custom_call.1} parent=1 // pred_fallthru
      _
    // Predicated region
    $region30: #{tpu_custom_call.1} parent=1 // pred_check
      _
    $region31: #{tpu_custom_call.1} parent=1 // pred_check_branch
      %65 = sbr.rel (0) target = $region33
    $region32: #{tpu_custom_call.1} parent=1 // pred_region
      _
    $region33: #{tpu_custom_call.1} parent=1 // pred_fallthru
      _
    // Predicated region
    $region34: #{tpu_custom_call.1} parent=1 // pred_check
      _
    $region35: #{tpu_custom_call.1} parent=1 // pred_check_branch
      %67 = sbr.rel (0) target = $region37
    $region36: #{tpu_custom_call.1} parent=1 // pred_region
      %s69 = ssub.s32 256, 256
      %70 = vsyncadd [#allocation9], %s69
      %s71 = sshll.u32 [#allocation8], 4
      %s72 = int_to_ptr.vmem [resolvable:$true] %s71
      %77 = dma.hbm_to_vmem [thread:$0]  %s8, 256, %s72, [#allocation9], 64, 64, 4
    $region37: #{tpu_custom_call.1} parent=1 // pred_fallthru
      _
    // Predicated region
    $region38: #{tpu_custom_call.1} parent=1 // pred_check
      _
    $region39: #{tpu_custom_call.1} parent=1 // pred_check_branch
      %79 = sbr.rel (0) target = $region41
    $region40: #{tpu_custom_call.1} parent=1 // pred_region
      _
    $region41: #{tpu_custom_call.1} parent=1 // pred_fallthru
      _
    // Predicated region
    $region42: #{tpu_custom_call.1} parent=1 // pred_check
      _
    $region43: #{tpu_custom_call.1} parent=1 // pred_check_branch
      %81 = sbr.rel (0) target = $region45
    $region44: #{tpu_custom_call.1} parent=1 // pred_region
      _
    $region45: #{tpu_custom_call.1} parent=1 // pred_fallthru
      _
    // Predicated region
    $region46: #{tpu_custom_call.1} parent=1 // pred_check
      _
    $region47: #{tpu_custom_call.1} parent=1 // pred_check_branch
      %83 = sbr.rel (0) target = $region49
    $region48: #{tpu_custom_call.1} parent=1 // pred_region
      %s85 = ssub.s32 256, 256
      %86 = vsyncadd [#allocation9], %s85
      %s87 = sshll.u32 [#allocation10], 4
      %s88 = int_to_ptr.vmem [resolvable:$true] %s87
      %93 = dma.hbm_to_vmem [thread:$0]  %s11, 256, %s88, [#allocation9], 64, 64, 4
    $region49: #{tpu_custom_call.1} parent=1 // pred_fallthru
      _
    // Predicated region
    $region50: #{tpu_custom_call.1} parent=1 // pred_check
      _
    $region51: #{tpu_custom_call.1} parent=1 // pred_check_branch
      %95 = sbr.rel (0) target = $region53
    $region52: #{tpu_custom_call.1} parent=1 // pred_region
      _
    $region53: #{tpu_custom_call.1} parent=1 // pred_fallthru
      _
    // Predicated region
    $region54: #{tpu_custom_call.1} parent=1 // pred_check
      _
    $region55: #{tpu_custom_call.1} parent=1 // pred_check_branch
      %97 = sbr.rel (0) target = $region57
    $region56: #{tpu_custom_call.1} parent=1 // pred_region
      %98 = dma.done [#allocation3], 512
    $region57: #{tpu_custom_call.1} parent=1 // pred_fallthru
      _
    // Predicated region
    $region58: #{tpu_custom_call.1} parent=1 // pred_check
      _
    $region59: #{tpu_custom_call.1} parent=1 // pred_check_branch
      %100 = sbr.rel (0) target = $region61
    $region60: #{tpu_custom_call.1} parent=1 // pred_region
      %101 = dma.done [#allocation6], 32
    $region61: #{tpu_custom_call.1} parent=1 // pred_fallthru
      _
    // Predicated region
    $region62: #{tpu_custom_call.1} parent=1 // pred_check
      _
    $region63: #{tpu_custom_call.1} parent=1 // pred_check_branch
      %103 = sbr.rel (0) target = $region65
    $region64: #{tpu_custom_call.1} parent=1 // pred_region
      %104 = dma.done [#allocation6], 256
    $region65: #{tpu_custom_call.1} parent=1 // pred_fallthru
      _
    // Predicated region
    $region66: #{tpu_custom_call.1} parent=1 // pred_check
      _
    $region67: #{tpu_custom_call.1} parent=1 // pred_check_branch
      %106 = sbr.rel (0) target = $region69
    $region68: #{tpu_custom_call.1} parent=1 // pred_region
      %107 = dma.done [#allocation9], 256
    $region69: #{tpu_custom_call.1} parent=1 // pred_fallthru
      _
    // Predicated region
    $region70: #{tpu_custom_call.1} parent=1 // pred_check
      _
    $region71: #{tpu_custom_call.1} parent=1 // pred_check_branch
      %109 = sbr.rel (0) target = $region73
    $region72: #{tpu_custom_call.1} parent=1 // pred_region
      %110 = dma.done [#allocation9], 256
    $region73: #{tpu_custom_call.1} parent=1 // pred_fallthru
      _
    %v112 = vld [vmem:[#allocation2] sm:$0xff]
    %v113 = vld [vmem:[#allocation2 + $0x8] sm:$0xff]
    %v114 = vld [vmem:[#allocation2 + $0x10] sm:$0xff]
    %v115 = vld [vmem:[#allocation2 + $0x18] sm:$0xff]
    %v116 = vpack.c.bf16 %v113, %v112
    %v117 = vpack.c.bf16 %v115, %v114
    %v118 = vld [vmem:[%s1] sm:$0xff]
    %v119 = vld [vmem:[%s1 + $0x8] sm:$0xff]
    %v120 = vpack.c.bf16 %v119, %v118
    %v121 = vld [vmem:[%s4] sm:$0xf]
    %v122 = vld [vmem:[%s4 + $0x4] sm:$0xf]
    %v123 = vld [vmem:[%s4 + $0x8] sm:$0xf]
    %v124 = vld [vmem:[%s4 + $0xc] sm:$0xf]
    %v125 = vld [vmem:[%s5] sm:$0x1]
    %v127 = vlaneseq
    %v128 = vshrl.u32 %v127, 7
    %v129 = vsub.s32 0, %v128
    %v130 = vrot.slane %v125, %v129
    %v136 = vunpack.c.l.b16 %v121
    %v137 = vunpack.c.l.b16 %v122
    %v138 = vunpack.c.l.b16 %v123
    %v139 = vunpack.c.l.b16 %v124
    %v140 = vpack.c.b16 %v137, %v136
    %v141 = vpack.c.b16 %v139, %v138
    %vm144 = vcmask 261120
    %v146 = vsel %vm144, %v116, 0
    %v149 = vsel %vm144, %v117, 0
    %151 = vmatprep.subr.bf16.mxu0 0
    %152 = vmatpush1.bf16.msra.mxu0 %v140
    %153 = vmatprep.subr.bf16.mxu0 0
    %154 = vmatpush1.bf16.msra.mxu0 %v141
    %155 = vmatprep.subr.bf16.mxu0 0
    %156 = vmatpush1.bf16.msra.mxu0 0
    %157 = vmatprep.subr.bf16.mxu0 0
    %158 = vmatpush1.bf16.msra.mxu0 0
    %159 = vmatprep.subr.bf16.mxu0 0
    %160 = vmatpush1.bf16.msra.mxu0 0
    %161 = vmatprep.subr.bf16.mxu0 0
    %162 = vmatpush1.bf16.msra.mxu0 0
    %163 = vmatprep.subr.bf16.mxu0 0
    %164 = vmatpush1.bf16.msra.mxu0 0
    %165 = vmatprep.subr.bf16.mxu0 0
    %166 = vmatpush1.bf16.msra.mxu0 0
    %167 = vmatprep.subr.bf16.mxu0 0
    %168 = vmatpush1.bf16.msra.mxu0 0
    %169 = vmatprep.subr.bf16.mxu0 0
    %170 = vmatpush1.bf16.msra.mxu0 0
    %171 = vmatprep.subr.bf16.mxu0 0
    %172 = vmatpush1.bf16.msra.mxu0 0
    %173 = vmatprep.subr.bf16.mxu0 0
    %174 = vmatpush1.bf16.msra.mxu0 0
    %175 = vmatprep.subr.bf16.mxu0 0
    %176 = vmatpush1.bf16.msra.mxu0 0
    %177 = vmatprep.subr.bf16.mxu0 0
    %178 = vmatpush1.bf16.msra.mxu0 0
    %179 = vmatprep.subr.bf16.mxu0 0
    %180 = vmatpush1.bf16.msra.mxu0 0
    %181 = vmatprep.subr.bf16.mxu0 0
    %182 = vmatpush1.bf16.msra.mxu0 0
    %183 = vmatprep.mubr.bf16.mxu0 0
    %184 = vmatmul.mubr.bf16.gmra.mrb[0].mxu0 %v146
    %v185 = vpop.f32.mrb[0].mxu0
    %v186 = vadd.f32 %v130, %v185
    %v187 = vpop.f32.mrb[0].mxu0
    %v188 = vpop.f32.mrb[0].mxu0
    %v189 = vadd.f32 %v130, %v188
    %v190 = vpop.f32.mrb[0].mxu0
    %191 = vmatprep.mubr.bf16.mxu0 0
    %192 = vmatmul.mubr.bf16.gmra.mrb[0].mxu0 %v149
    %v193 = vpop.f32.mrb[0].mxu0
    %v194 = vadd.f32 %v130, %v193
    %v195 = vpop.f32.mrb[0].mxu0
    %v196 = vpop.f32.mrb[0].mxu0
    %v197 = vadd.f32 %v130, %v196
    %v198 = vpop.f32.mrb[0].mxu0
    %199 = vdwg.mxu0
    %v200 = vld [vmem:[#allocation7] sm:$0xf]
    %v201 = vld [vmem:[#allocation7 + $0x4] sm:$0xf]
    %v202 = vld [vmem:[#allocation7 + $0x8] sm:$0xf]
    %v203 = vld [vmem:[#allocation7 + $0xc] sm:$0xf]
    %v204 = vld [vmem:[%s7] sm:$0x1]
    %v206 = vlaneseq
    %v207 = vshrl.u32 %v206, 7
    %v208 = vsub.s32 0, %v207
    %v209 = vrot.slane %v204, %v208
    %v215 = vunpack.c.l.b16 %v200
    %v216 = vunpack.c.l.b16 %v201
    %v217 = vunpack.c.l.b16 %v202
    %v218 = vunpack.c.l.b16 %v203
    %v219 = vpack.c.b16 %v216, %v215
    %v220 = vpack.c.b16 %v218, %v217
    %223 = vmatprep.subr.bf16.mxu0 0
    %224 = vmatpush1.bf16.msra.mxu0 %v219
    %225 = vmatprep.subr.bf16.mxu0 0
    %226 = vmatpush1.bf16.msra.mxu0 %v220
    %227 = vmatprep.subr.bf16.mxu0 0
    %228 = vmatpush1.bf16.msra.mxu0 0
    %229 = vmatprep.subr.bf16.mxu0 0
    %230 = vmatpush1.bf16.msra.mxu0 0
    %231 = vmatprep.subr.bf16.mxu0 0
    %232 = vmatpush1.bf16.msra.mxu0 0
    %233 = vmatprep.subr.bf16.mxu0 0
    %234 = vmatpush1.bf16.msra.mxu0 0
    %235 = vmatprep.subr.bf16.mxu0 0
    %236 = vmatpush1.bf16.msra.mxu0 0
    %237 = vmatprep.subr.bf16.mxu0 0
    %238 = vmatpush1.bf16.msra.mxu0 0
    %239 = vmatprep.subr.bf16.mxu0 0
    %240 = vmatpush1.bf16.msra.mxu0 0
    %241 = vmatprep.subr.bf16.mxu0 0
    %242 = vmatpush1.bf16.msra.mxu0 0
    %243 = vmatprep.subr.bf16.mxu0 0
    %244 = vmatpush1.bf16.msra.mxu0 0
    %245 = vmatprep.subr.bf16.mxu0 0
    %246 = vmatpush1.bf16.msra.mxu0 0
    %247 = vmatprep.subr.bf16.mxu0 0
    %248 = vmatpush1.bf16.msra.mxu0 0
    %249 = vmatprep.subr.bf16.mxu0 0
    %250 = vmatpush1.bf16.msra.mxu0 0
    %251 = vmatprep.subr.bf16.mxu0 0
    %252 = vmatpush1.bf16.msra.mxu0 0
    %253 = vmatprep.subr.bf16.mxu0 0
    %254 = vmatpush1.bf16.msra.mxu0 0
    %255 = vmatprep.mubr.bf16.mxu0 0
    %256 = vmatmul.mubr.bf16.gmra.mrb[0].mxu0 %v146
    %v257 = vpop.f32.mrb[0].mxu0
    %v258 = vadd.f32 %v209, %v257
    %v259 = vpop.f32.mrb[0].mxu0
    %v260 = vpop.f32.mrb[0].mxu0
    %v261 = vadd.f32 %v209, %v260
    %v262 = vpop.f32.mrb[0].mxu0
    %263 = vmatprep.mubr.bf16.mxu0 0
    %264 = vmatmul.mubr.bf16.gmra.mrb[0].mxu0 %v149
    %v265 = vpop.f32.mrb[0].mxu0
    %v266 = vadd.f32 %v209, %v265
    %v267 = vpop.f32.mrb[0].mxu0
    %v268 = vpop.f32.mrb[0].mxu0
    %v269 = vadd.f32 %v209, %v268
    %v270 = vpop.f32.mrb[0].mxu0
    %271 = vdwg.mxu0
    %v272 = vld [vmem:[#allocation8] sm:$0xf]
    %v273 = vld [vmem:[#allocation8 + $0x4] sm:$0xf]
    %v274 = vld [vmem:[#allocation8 + $0x8] sm:$0xf]
    %v275 = vld [vmem:[#allocation8 + $0xc] sm:$0xf]
    %v276 = vld [vmem:[%s9] sm:$0x1]
    %v278 = vlaneseq
    %v279 = vshrl.u32 %v278, 7
    %v280 = vsub.s32 0, %v279
    %v281 = vrot.slane %v276, %v280
    %v287 = vunpack.c.l.b16 %v272
    %v288 = vunpack.c.l.b16 %v273
    %v289 = vunpack.c.l.b16 %v274
    %v290 = vunpack.c.l.b16 %v275
    %v291 = vpack.c.b16 %v288, %v287
    %v292 = vpack.c.b16 %v290, %v289
    %v296 = vsel %vm144, %v120, 0
    %298 = vmatprep.subr.bf16.mxu0 0
    %299 = vmatpush1.bf16.msra.mxu0 %v291
    %300 = vmatprep.subr.bf16.mxu0 0
    %301 = vmatpush1.bf16.msra.mxu0 %v292
    %302 = vmatprep.subr.bf16.mxu0 0
    %303 = vmatpush1.bf16.msra.mxu0 0
    %304 = vmatprep.subr.bf16.mxu0 0
    %305 = vmatpush1.bf16.msra.mxu0 0
    %306 = vmatprep.subr.bf16.mxu0 0
    %307 = vmatpush1.bf16.msra.mxu0 0
    %308 = vmatprep.subr.bf16.mxu0 0
    %309 = vmatpush1.bf16.msra.mxu0 0
    %310 = vmatprep.subr.bf16.mxu0 0
    %311 = vmatpush1.bf16.msra.mxu0 0
    %312 = vmatprep.subr.bf16.mxu0 0
    %313 = vmatpush1.bf16.msra.mxu0 0
    %314 = vmatprep.subr.bf16.mxu0 0
    %315 = vmatpush1.bf16.msra.mxu0 0
    %316 = vmatprep.subr.bf16.mxu0 0
    %317 = vmatpush1.bf16.msra.mxu0 0
    %318 = vmatprep.subr.bf16.mxu0 0
    %319 = vmatpush1.bf16.msra.mxu0 0
    %320 = vmatprep.subr.bf16.mxu0 0
    %321 = vmatpush1.bf16.msra.mxu0 0
    %322 = vmatprep.subr.bf16.mxu0 0
    %323 = vmatpush1.bf16.msra.mxu0 0
    %324 = vmatprep.subr.bf16.mxu0 0
    %325 = vmatpush1.bf16.msra.mxu0 0
    %326 = vmatprep.subr.bf16.mxu0 0
    %327 = vmatpush1.bf16.msra.mxu0 0
    %328 = vmatprep.subr.bf16.mxu0 0
    %329 = vmatpush1.bf16.msra.mxu0 0
    %330 = vmatprep.mubr.bf16.mxu0 0
    %331 = vmatmul.mubr.bf16.gmra.mrb[0].mxu0 %v296
    %v332 = vpop.f32.mrb[0].mxu0
    %v333 = vadd.f32 %v281, %v332
    %v334 = vpop.f32.mrb[0].mxu0
    %v335 = vpop.f32.mrb[0].mxu0
    %v336 = vadd.f32 %v281, %v335
    %v337 = vpop.f32.mrb[0].mxu0
    %338 = vdwg.mxu0
    %v339 = vld [vmem:[%s3] sm:$0xff]
    %v340 = vld [vmem:[%s3 + $0x8] sm:$0xff]
    %342 = vset.pattern.permute.xlu0 0
    %343 = vperm.xlu0 %342, %v339
    %v344 = vpop.permute.xlu0 %343
    %347 = vset.pattern.permute.xlu0 0
    %348 = vperm.xlu0 %347, %v340
    %v349 = vpop.permute.xlu0 %348
    %v351 = vmul.f32 %v333, %v344
    %v352 = vmul.f32 %v336, %v349
    %v353 = vld [vmem:[%s10] sm:$0xf]
    %v354 = vld [vmem:[%s10 + $0x4] sm:$0xf]
    %v355 = vld [vmem:[%s10 + $0x8] sm:$0xf]
    %v356 = vld [vmem:[%s10 + $0xc] sm:$0xf]
    %v357 = vld [vmem:[%s12] sm:$0x1]
    %v359 = vlaneseq
    %v360 = vshrl.u32 %v359, 7
    %v361 = vsub.s32 0, %v360
    %v362 = vrot.slane %v357, %v361
    %v368 = vunpack.c.l.b16 %v353
    %v369 = vunpack.c.l.b16 %v354
    %v370 = vunpack.c.l.b16 %v355
    %v371 = vunpack.c.l.b16 %v356
    %v372 = vpack.c.b16 %v369, %v368
    %v373 = vpack.c.b16 %v371, %v370
    %376 = vmatprep.subr.bf16.mxu0 0
    %377 = vmatpush1.bf16.msra.mxu0 %v372
    %378 = vmatprep.subr.bf16.mxu0 0
    %379 = vmatpush1.bf16.msra.mxu0 %v373
    %380 = vmatprep.subr.bf16.mxu0 0
    %381 = vmatpush1.bf16.msra.mxu0 0
    %382 = vmatprep.subr.bf16.mxu0 0
    %383 = vmatpush1.bf16.msra.mxu0 0
    %384 = vmatprep.subr.bf16.mxu0 0
    %385 = vmatpush1.bf16.msra.mxu0 0
    %386 = vmatprep.subr.bf16.mxu0 0
    %387 = vmatpush1.bf16.msra.mxu0 0
    %388 = vmatprep.subr.bf16.mxu0 0
    %389 = vmatpush1.bf16.msra.mxu0 0
    %390 = vmatprep.subr.bf16.mxu0 0
    %391 = vmatpush1.bf16.msra.mxu0 0
    %392 = vmatprep.subr.bf16.mxu0 0
    %393 = vmatpush1.bf16.msra.mxu0 0
    %394 = vmatprep.subr.bf16.mxu0 0
    %395 = vmatpush1.bf16.msra.mxu0 0
    %396 = vmatprep.subr.bf16.mxu0 0
    %397 = vmatpush1.bf16.msra.mxu0 0
    %398 = vmatprep.subr.bf16.mxu0 0
    %399 = vmatpush1.bf16.msra.mxu0 0
    %400 = vmatprep.subr.bf16.mxu0 0
    %401 = vmatpush1.bf16.msra.mxu0 0
    %402 = vmatprep.subr.bf16.mxu0 0
    %403 = vmatpush1.bf16.msra.mxu0 0
    %404 = vmatprep.subr.bf16.mxu0 0
    %405 = vmatpush1.bf16.msra.mxu0 0
    %406 = vmatprep.subr.bf16.mxu0 0
    %407 = vmatpush1.bf16.msra.mxu0 0
    %408 = vmatprep.mubr.bf16.mxu0 0
    %409 = vmatmul.mubr.bf16.gmra.mrb[0].mxu0 %v296
    %v410 = vpop.f32.mrb[0].mxu0
    %v411 = vadd.f32 %v362, %v410
    %v412 = vpop.f32.mrb[0].mxu0
    %v413 = vpop.f32.mrb[0].mxu0
    %v414 = vadd.f32 %v362, %v413
    %v415 = vpop.f32.mrb[0].mxu0
    %416 = vdwg.mxu0
    %417 = vst [vmem:[#allocation11] sm:$0xff] %v411
    %418 = vst [vmem:[#allocation11 + $0x8] sm:$0xff] %v414
    %v419 = vpack.c.bf16 %v189, %v186
    %v420 = vpack.c.bf16 %v197, %v194
    %v421 = vpack.c.bf16 %v261, %v258
    %v422 = vpack.c.bf16 %v269, %v266
    %v423 = vpack.c.bf16 %v352, %v351
    %v424 = vld [vmem:[#allocation5] sm:$0x3]
    %v425 = vlaneseq
    %v426 = vshrl.u32 %v425, 7
    %v427 = vsub.s32 0, %v426
    %v428 = vrot.slane %v424, %v427
    %vm429 = vcmask 64512
    %v431 = vsel %vm429, %v423, 0
    %v434 = vsel %vm429, %v419, 0
    %436 = vmatprep.subr.bf16.mxu0 0
    %437 = vmatpush1.bf16.xpose.msra.mxu0 %v434
    %438 = vmatprep.subr.bf16.mxu0 0
    %439 = vmatpush1.bf16.xpose.msra.mxu0 0
    %440 = vmatprep.subr.bf16.mxu0 0
    %441 = vmatpush1.bf16.xpose.msra.mxu0 0
    %442 = vmatprep.subr.bf16.mxu0 0
    %443 = vmatpush1.bf16.xpose.msra.mxu0 0
    %444 = vmatprep.subr.bf16.mxu0 0
    %445 = vmatpush1.bf16.xpose.msra.mxu0 0
    %446 = vmatprep.subr.bf16.mxu0 0
    %447 = vmatpush1.bf16.xpose.msra.mxu0 0
    %448 = vmatprep.subr.bf16.mxu0 0
    %449 = vmatpush1.bf16.xpose.msra.mxu0 0
    %450 = vmatprep.subr.bf16.mxu0 0
    %451 = vmatpush1.bf16.xpose.msra.mxu0 0
    %452 = vmatprep.subr.bf16.mxu0 0
    %453 = vmatpush1.bf16.xpose.msra.mxu0 0
    %454 = vmatprep.subr.bf16.mxu0 0
    %455 = vmatpush1.bf16.xpose.msra.mxu0 0
    %456 = vmatprep.subr.bf16.mxu0 0
    %457 = vmatpush1.bf16.xpose.msra.mxu0 0
    %458 = vmatprep.subr.bf16.mxu0 0
    %459 = vmatpush1.bf16.xpose.msra.mxu0 0
    %460 = vmatprep.subr.bf16.mxu0 0
    %461 = vmatpush1.bf16.xpose.msra.mxu0 0
    %462 = vmatprep.subr.bf16.mxu0 0
    %463 = vmatpush1.bf16.xpose.msra.mxu0 0
    %464 = vmatprep.subr.bf16.mxu0 0
    %465 = vmatpush1.bf16.xpose.msra.mxu0 0
    %466 = vmatprep.subr.bf16.mxu0 0
    %467 = vmatpush1.bf16.xpose.msra.mxu0 0
    %468 = vmatprep.mubr.bf16.mxu0 0
    %469 = vmatmul.mubr.bf16.gmra.mrb[0].mxu0 %v431
    %v470 = vpop.f32.mrb[0].mxu0
    %v471 = vadd.f32 %v428, %v470
    %v472 = vpop.f32.mrb[0].mxu0
    %v473 = vpop.f32.mrb[0].mxu0
    %v474 = vpop.f32.mrb[0].mxu0
    %475 = vdwg.mxu0
    %vm476 = vcmask 130048
    %v477 = vsel %vm476, %v471, -inf
    %478 = vmax.xlane.f32.xlu0 %v477
    %v479 = vpop.xlane.xlu0 %478
    %v480 = vsub.f32 %v471, %v479
    %v481 = vmul.f32 %v480, 1.442695
    %v482 = vpow.pop %v481
    %v483 = vsel %vm476, %v482, 0.0
    %484 = vadd.xlane.f32.xlu0 %v483
    %v485 = vpop.xlane.xlu0 %484
    %v486 = vrcp.pop %v485
    %v487 = vmul.f32 %v482, %v486
    %v488 = vpack.c.bf16 %v487, %v487
    %v490 = vsel %vm476, %v488, 0
    %492 = vmatprep.subr.bf16.mxu0 0
    %493 = vmatpush1.bf16.msra.mxu0 %v421
    %494 = vmatprep.subr.bf16.mxu0 0
    %495 = vmatpush1.bf16.msra.mxu0 0
    %496 = vmatprep.subr.bf16.mxu0 0
    %497 = vmatpush1.bf16.msra.mxu0 0
    %498 = vmatprep.subr.bf16.mxu0 0
    %499 = vmatpush1.bf16.msra.mxu0 0
    %500 = vmatprep.subr.bf16.mxu0 0
    %501 = vmatpush1.bf16.msra.mxu0 0
    %502 = vmatprep.subr.bf16.mxu0 0
    %503 = vmatpush1.bf16.msra.mxu0 0
    %504 = vmatprep.subr.bf16.mxu0 0
    %505 = vmatpush1.bf16.msra.mxu0 0
    %506 = vmatprep.subr.bf16.mxu0 0
    %507 = vmatpush1.bf16.msra.mxu0 0
    %508 = vmatprep.subr.bf16.mxu0 0
    %509 = vmatpush1.bf16.msra.mxu0 0
    %510 = vmatprep.subr.bf16.mxu0 0
    %511 = vmatpush1.bf16.msra.mxu0 0
    %512 = vmatprep.subr.bf16.mxu0 0
    %513 = vmatpush1.bf16.msra.mxu0 0
    %514 = vmatprep.subr.bf16.mxu0 0
    %515 = vmatpush1.bf16.msra.mxu0 0
    %516 = vmatprep.subr.bf16.mxu0 0
    %517 = vmatpush1.bf16.msra.mxu0 0
    %518 = vmatprep.subr.bf16.mxu0 0
    %519 = vmatpush1.bf16.msra.mxu0 0
    %520 = vmatprep.subr.bf16.mxu0 0
    %521 = vmatpush1.bf16.msra.mxu0 0
    %522 = vmatprep.subr.bf16.mxu0 0
    %523 = vmatpush1.bf16.msra.mxu0 0
    %524 = vmatprep.mubr.bf16.mxu0 0
    %525 = vmatmul.mubr.bf16.gmra.mrb[0].mxu0 %v490
    %v526 = vpop.f32.mrb[0].mxu0
    %v527 = vadd.f32 0.0, %v526
    %v528 = vpop.f32.mrb[0].mxu0
    %v529 = vpop.f32.mrb[0].mxu0
    %v530 = vpop.f32.mrb[0].mxu0
    %531 = vdwg.mxu0
    %v532 = vpack.c.bf16 %v527, %v527
    %v533 = vld [vmem:[#allocation10] sm:$0xf]
    %535 = vrot.lane.b32.xlu0 %v423, 120
    %v536 = vpop.permute.xlu0 %535
    %538 = vrot.lane.b32.xlu0 %v419, 120
    %v539 = vpop.permute.xlu0 %538
    %v541 = vsel %vm429, %v536, 0
    %v544 = vsel %vm429, %v539, 0
    %546 = vmatprep.subr.bf16.mxu0 0
    %547 = vmatpush1.bf16.xpose.msra.mxu0 %v544
    %548 = vmatprep.subr.bf16.mxu0 0
    %549 = vmatpush1.bf16.xpose.msra.mxu0 0
    %550 = vmatprep.subr.bf16.mxu0 0
    %551 = vmatpush1.bf16.xpose.msra.mxu0 0
    %552 = vmatprep.subr.bf16.mxu0 0
    %553 = vmatpush1.bf16.xpose.msra.mxu0 0
    %554 = vmatprep.subr.bf16.mxu0 0
    %555 = vmatpush1.bf16.xpose.msra.mxu0 0
    %556 = vmatprep.subr.bf16.mxu0 0
    %557 = vmatpush1.bf16.xpose.msra.mxu0 0
    %558 = vmatprep.subr.bf16.mxu0 0
    %559 = vmatpush1.bf16.xpose.msra.mxu0 0
    %560 = vmatprep.subr.bf16.mxu0 0
    %561 = vmatpush1.bf16.xpose.msra.mxu0 0
    %562 = vmatprep.subr.bf16.mxu0 0
    %563 = vmatpush1.bf16.xpose.msra.mxu0 0
    %564 = vmatprep.subr.bf16.mxu0 0
    %565 = vmatpush1.bf16.xpose.msra.mxu0 0
    %566 = vmatprep.subr.bf16.mxu0 0
    %567 = vmatpush1.bf16.xpose.msra.mxu0 0
    %568 = vmatprep.subr.bf16.mxu0 0
    %569 = vmatpush1.bf16.xpose.msra.mxu0 0
    %570 = vmatprep.subr.bf16.mxu0 0
    %571 = vmatpush1.bf16.xpose.msra.mxu0 0
    %572 = vmatprep.subr.bf16.mxu0 0
    %573 = vmatpush1.bf16.xpose.msra.mxu0 0
    %574 = vmatprep.subr.bf16.mxu0 0
    %575 = vmatpush1.bf16.xpose.msra.mxu0 0
    %576 = vmatprep.subr.bf16.mxu0 0
    %577 = vmatpush1.bf16.xpose.msra.mxu0 0
    %578 = vmatprep.mubr.bf16.mxu0 0
    %579 = vmatmul.mubr.bf16.gmra.mrb[0].mxu0 %v541
    %v580 = vpop.f32.mrb[0].mxu0
    %v581 = vadd.f32 %v428, %v580
    %v582 = vpop.f32.mrb[0].mxu0
    %v583 = vpop.f32.mrb[0].mxu0
    %v584 = vpop.f32.mrb[0].mxu0
    %585 = vdwg.mxu0
    %v586 = vsel %vm476, %v581, -inf
    %587 = vmax.xlane.f32.xlu0 %v586
    %v588 = vpop.xlane.xlu0 %587
    %v589 = vsub.f32 %v581, %v588
    %v590 = vmul.f32 %v589, 1.442695
    %v591 = vpow.pop %v590
    %v592 = vsel %vm476, %v591, 0.0
    %593 = vadd.xlane.f32.xlu0 %v592
    %v594 = vpop.xlane.xlu0 %593
    %v595 = vrcp.pop %v594
    %v596 = vmul.f32 %v591, %v595
    %v597 = vpack.c.bf16 %v596, %v596
    %599 = vrot.lane.b32.xlu0 %v421, 120
    %v600 = vpop.permute.xlu0 %599
    %v603 = vsel %vm476, %v597, 0
    %605 = vmatprep.subr.bf16.mxu0 0
    %606 = vmatpush1.bf16.msra.mxu0 %v600
    %607 = vmatprep.subr.bf16.mxu0 0
    %608 = vmatpush1.bf16.msra.mxu0 0
    %609 = vmatprep.subr.bf16.mxu0 0
    %610 = vmatpush1.bf16.msra.mxu0 0
    %611 = vmatprep.subr.bf16.mxu0 0
    %612 = vmatpush1.bf16.msra.mxu0 0
    %613 = vmatprep.subr.bf16.mxu0 0
    %614 = vmatpush1.bf16.msra.mxu0 0
    %615 = vmatprep.subr.bf16.mxu0 0
    %616 = vmatpush1.bf16.msra.mxu0 0
    %617 = vmatprep.subr.bf16.mxu0 0
    %618 = vmatpush1.bf16.msra.mxu0 0
    %619 = vmatprep.subr.bf16.mxu0 0
    %620 = vmatpush1.bf16.msra.mxu0 0
    %621 = vmatprep.subr.bf16.mxu0 0
    %622 = vmatpush1.bf16.msra.mxu0 0
    %623 = vmatprep.subr.bf16.mxu0 0
    %624 = vmatpush1.bf16.msra.mxu0 0
    %625 = vmatprep.subr.bf16.mxu0 0
    %626 = vmatpush1.bf16.msra.mxu0 0
    %627 = vmatprep.subr.bf16.mxu0 0
    %628 = vmatpush1.bf16.msra.mxu0 0
    %629 = vmatprep.subr.bf16.mxu0 0
    %630 = vmatpush1.bf16.msra.mxu0 0
    %631 = vmatprep.subr.bf16.mxu0 0
    %632 = vmatpush1.bf16.msra.mxu0 0
    %633 = vmatprep.subr.bf16.mxu0 0
    %634 = vmatpush1.bf16.msra.mxu0 0
    %635 = vmatprep.subr.bf16.mxu0 0
    %636 = vmatpush1.bf16.msra.mxu0 0
    %637 = vmatprep.mubr.bf16.mxu0 0
    %638 = vmatmul.mubr.bf16.gmra.mrb[0].mxu0 %v603
    %v639 = vpop.f32.mrb[0].mxu0
    %v640 = vadd.f32 0.0, %v639
    %v641 = vpop.f32.mrb[0].mxu0
    %v642 = vpop.f32.mrb[0].mxu0
    %v643 = vpop.f32.mrb[0].mxu0
    %644 = vdwg.mxu0
    %v645 = vpack.c.bf16 %v640, %v640
    %v646 = vld [vmem:[#allocation10 + $0x4] sm:$0xf]
    %v648 = vsel %vm429, %v645, 0
    %vm650 = vcmask 1043456
    %v652 = vsel %vm650, %v646, 0
    %654 = vmatprep.subr.bf16.mxu0 0
    %655 = vmatpush1.bf16.msra.mxu0 %v652
    %656 = vmatprep.subr.bf16.mxu0 0
    %657 = vmatpush1.bf16.msra.mxu0 0
    %658 = vmatprep.subr.bf16.mxu0 0
    %659 = vmatpush1.bf16.msra.mxu0 0
    %660 = vmatprep.subr.bf16.mxu0 0
    %661 = vmatpush1.bf16.msra.mxu0 0
    %662 = vmatprep.subr.bf16.mxu0 0
    %663 = vmatpush1.bf16.msra.mxu0 0
    %664 = vmatprep.subr.bf16.mxu0 0
    %665 = vmatpush1.bf16.msra.mxu0 0
    %666 = vmatprep.subr.bf16.mxu0 0
    %667 = vmatpush1.bf16.msra.mxu0 0
    %668 = vmatprep.subr.bf16.mxu0 0
    %669 = vmatpush1.bf16.msra.mxu0 0
    %670 = vmatprep.subr.bf16.mxu0 0
    %671 = vmatpush1.bf16.msra.mxu0 0
    %672 = vmatprep.subr.bf16.mxu0 0
    %673 = vmatpush1.bf16.msra.mxu0 0
    %674 = vmatprep.subr.bf16.mxu0 0
    %675 = vmatpush1.bf16.msra.mxu0 0
    %676 = vmatprep.subr.bf16.mxu0 0
    %677 = vmatpush1.bf16.msra.mxu0 0
    %678 = vmatprep.subr.bf16.mxu0 0
    %679 = vmatpush1.bf16.msra.mxu0 0
    %680 = vmatprep.subr.bf16.mxu0 0
    %681 = vmatpush1.bf16.msra.mxu0 0
    %682 = vmatprep.subr.bf16.mxu0 0
    %683 = vmatpush1.bf16.msra.mxu0 0
    %684 = vmatprep.subr.bf16.mxu0 0
    %685 = vmatpush1.bf16.msra.mxu0 0
    %686 = vmatprep.mubr.bf16.mxu0 0
    %687 = vmatmul.mubr.bf16.gmra.mrb[0].mxu0 %v648
    %v688 = vpop.f32.mrb[0].mxu0
    %v689 = vadd.f32 0.0, %v688
    %v690 = vpop.f32.mrb[0].mxu0
    %v691 = vpop.f32.mrb[0].mxu0
    %v692 = vpop.f32.mrb[0].mxu0
    %693 = vdwg.mxu0
    %v695 = vsel %vm429, %v532, 0
    %v698 = vsel %vm650, %v533, 0
    %700 = vmatprep.subr.bf16.mxu0 0
    %701 = vmatpush1.bf16.msra.mxu0 %v698
    %702 = vmatprep.subr.bf16.mxu0 0
    %703 = vmatpush1.bf16.msra.mxu0 0
    %704 = vmatprep.subr.bf16.mxu0 0
    %705 = vmatpush1.bf16.msra.mxu0 0
    %706 = vmatprep.subr.bf16.mxu0 0
    %707 = vmatpush1.bf16.msra.mxu0 0
    %708 = vmatprep.subr.bf16.mxu0 0
    %709 = vmatpush1.bf16.msra.mxu0 0
    %710 = vmatprep.subr.bf16.mxu0 0
    %711 = vmatpush1.bf16.msra.mxu0 0
    %712 = vmatprep.subr.bf16.mxu0 0
    %713 = vmatpush1.bf16.msra.mxu0 0
    %714 = vmatprep.subr.bf16.mxu0 0
    %715 = vmatpush1.bf16.msra.mxu0 0
    %716 = vmatprep.subr.bf16.mxu0 0
    %717 = vmatpush1.bf16.msra.mxu0 0
    %718 = vmatprep.subr.bf16.mxu0 0
    %719 = vmatpush1.bf16.msra.mxu0 0
    %720 = vmatprep.subr.bf16.mxu0 0
    %721 = vmatpush1.bf16.msra.mxu0 0
    %722 = vmatprep.subr.bf16.mxu0 0
    %723 = vmatpush1.bf16.msra.mxu0 0
    %724 = vmatprep.subr.bf16.mxu0 0
    %725 = vmatpush1.bf16.msra.mxu0 0
    %726 = vmatprep.subr.bf16.mxu0 0
    %727 = vmatpush1.bf16.msra.mxu0 0
    %728 = vmatprep.subr.bf16.mxu0 0
    %729 = vmatpush1.bf16.msra.mxu0 0
    %730 = vmatprep.subr.bf16.mxu0 0
    %731 = vmatpush1.bf16.msra.mxu0 0
    %732 = vmatprep.mubr.bf16.mxu0 0
    %733 = vmatmul.mubr.bf16.gmra.mrb[0].mxu0 %v695
    %v734 = vpop.f32.mrb[0].mxu0
    %v735 = vadd.f32 %v689, %v734
    %v736 = vpop.f32.mrb[0].mxu0
    %v737 = vpop.f32.mrb[0].mxu0
    %v738 = vpop.f32.mrb[0].mxu0
    %739 = vdwg.mxu0
    %740 = vrot.lane.b32.xlu0 %v423, 112
    %v741 = vpop.permute.xlu0 %740
    %742 = vrot.lane.b32.xlu0 %v419, 112
    %v743 = vpop.permute.xlu0 %742
    %v745 = vsel %vm429, %v741, 0
    %v748 = vsel %vm429, %v743, 0
    %750 = vmatprep.subr.bf16.mxu0 0
    %751 = vmatpush1.bf16.xpose.msra.mxu0 %v748
    %752 = vmatprep.subr.bf16.mxu0 0
    %753 = vmatpush1.bf16.xpose.msra.mxu0 0
    %754 = vmatprep.subr.bf16.mxu0 0
    %755 = vmatpush1.bf16.xpose.msra.mxu0 0
    %756 = vmatprep.subr.bf16.mxu0 0
    %757 = vmatpush1.bf16.xpose.msra.mxu0 0
    %758 = vmatprep.subr.bf16.mxu0 0
    %759 = vmatpush1.bf16.xpose.msra.mxu0 0
    %760 = vmatprep.subr.bf16.mxu0 0
    %761 = vmatpush1.bf16.xpose.msra.mxu0 0
    %762 = vmatprep.subr.bf16.mxu0 0
    %763 = vmatpush1.bf16.xpose.msra.mxu0 0
    %764 = vmatprep.subr.bf16.mxu0 0
    %765 = vmatpush1.bf16.xpose.msra.mxu0 0
    %766 = vmatprep.subr.bf16.mxu0 0
    %767 = vmatpush1.bf16.xpose.msra.mxu0 0
    %768 = vmatprep.subr.bf16.mxu0 0
    %769 = vmatpush1.bf16.xpose.msra.mxu0 0
    %770 = vmatprep.subr.bf16.mxu0 0
    %771 = vmatpush1.bf16.xpose.msra.mxu0 0
    %772 = vmatprep.subr.bf16.mxu0 0
    %773 = vmatpush1.bf16.xpose.msra.mxu0 0
    %774 = vmatprep.subr.bf16.mxu0 0
    %775 = vmatpush1.bf16.xpose.msra.mxu0 0
    %776 = vmatprep.subr.bf16.mxu0 0
    %777 = vmatpush1.bf16.xpose.msra.mxu0 0
    %778 = vmatprep.subr.bf16.mxu0 0
    %779 = vmatpush1.bf16.xpose.msra.mxu0 0
    %780 = vmatprep.subr.bf16.mxu0 0
    %781 = vmatpush1.bf16.xpose.msra.mxu0 0
    %782 = vmatprep.mubr.bf16.mxu0 0
    %783 = vmatmul.mubr.bf16.gmra.mrb[0].mxu0 %v745
    %v784 = vpop.f32.mrb[0].mxu0
    %v785 = vadd.f32 %v428, %v784
    %v786 = vpop.f32.mrb[0].mxu0
    %v787 = vpop.f32.mrb[0].mxu0
    %v788 = vpop.f32.mrb[0].mxu0
    %789 = vdwg.mxu0
    %v790 = vsel %vm476, %v785, -inf
    %791 = vmax.xlane.f32.xlu0 %v790
    %v792 = vpop.xlane.xlu0 %791
    %v793 = vsub.f32 %v785, %v792
    %v794 = vmul.f32 %v793, 1.442695
    %v795 = vpow.pop %v794
    %v796 = vsel %vm476, %v795, 0.0
    %797 = vadd.xlane.f32.xlu0 %v796
    %v798 = vpop.xlane.xlu0 %797
    %v799 = vrcp.pop %v798
    %v800 = vmul.f32 %v795, %v799
    %v801 = vpack.c.bf16 %v800, %v800
    %802 = vrot.lane.b32.xlu0 %v421, 112
    %v803 = vpop.permute.xlu0 %802
    %v806 = vsel %vm476, %v801, 0
    %808 = vmatprep.subr.bf16.mxu0 0
    %809 = vmatpush1.bf16.msra.mxu0 %v803
    %810 = vmatprep.subr.bf16.mxu0 0
    %811 = vmatpush1.bf16.msra.mxu0 0
    %812 = vmatprep.subr.bf16.mxu0 0
    %813 = vmatpush1.bf16.msra.mxu0 0
    %814 = vmatprep.subr.bf16.mxu0 0
    %815 = vmatpush1.bf16.msra.mxu0 0
    %816 = vmatprep.subr.bf16.mxu0 0
    %817 = vmatpush1.bf16.msra.mxu0 0
    %818 = vmatprep.subr.bf16.mxu0 0
    %819 = vmatpush1.bf16.msra.mxu0 0
    %820 = vmatprep.subr.bf16.mxu0 0
    %821 = vmatpush1.bf16.msra.mxu0 0
    %822 = vmatprep.subr.bf16.mxu0 0
    %823 = vmatpush1.bf16.msra.mxu0 0
    %824 = vmatprep.subr.bf16.mxu0 0
    %825 = vmatpush1.bf16.msra.mxu0 0
    %826 = vmatprep.subr.bf16.mxu0 0
    %827 = vmatpush1.bf16.msra.mxu0 0
    %828 = vmatprep.subr.bf16.mxu0 0
    %829 = vmatpush1.bf16.msra.mxu0 0
    %830 = vmatprep.subr.bf16.mxu0 0
    %831 = vmatpush1.bf16.msra.mxu0 0
    %832 = vmatprep.subr.bf16.mxu0 0
    %833 = vmatpush1.bf16.msra.mxu0 0
    %834 = vmatprep.subr.bf16.mxu0 0
    %835 = vmatpush1.bf16.msra.mxu0 0
    %836 = vmatprep.subr.bf16.mxu0 0
    %837 = vmatpush1.bf16.msra.mxu0 0
    %838 = vmatprep.subr.bf16.mxu0 0
    %839 = vmatpush1.bf16.msra.mxu0 0
    %840 = vmatprep.mubr.bf16.mxu0 0
    %841 = vmatmul.mubr.bf16.gmra.mrb[0].mxu0 %v806
    %v842 = vpop.f32.mrb[0].mxu0
    %v843 = vadd.f32 0.0, %v842
    %v844 = vpop.f32.mrb[0].mxu0
    %v845 = vpop.f32.mrb[0].mxu0
    %v846 = vpop.f32.mrb[0].mxu0
    %847 = vdwg.mxu0
    %v848 = vpack.c.bf16 %v843, %v843
    %v849 = vld [vmem:[#allocation10 + $0x8] sm:$0xf]
    %v851 = vsel %vm429, %v848, 0
    %v854 = vsel %vm650, %v849, 0
    %856 = vmatprep.subr.bf16.mxu0 0
    %857 = vmatpush1.bf16.msra.mxu0 %v854
    %858 = vmatprep.subr.bf16.mxu0 0
    %859 = vmatpush1.bf16.msra.mxu0 0
    %860 = vmatprep.subr.bf16.mxu0 0
    %861 = vmatpush1.bf16.msra.mxu0 0
    %862 = vmatprep.subr.bf16.mxu0 0
    %863 = vmatpush1.bf16.msra.mxu0 0
    %864 = vmatprep.subr.bf16.mxu0 0
    %865 = vmatpush1.bf16.msra.mxu0 0
    %866 = vmatprep.subr.bf16.mxu0 0
    %867 = vmatpush1.bf16.msra.mxu0 0
    %868 = vmatprep.subr.bf16.mxu0 0
    %869 = vmatpush1.bf16.msra.mxu0 0
    %870 = vmatprep.subr.bf16.mxu0 0
    %871 = vmatpush1.bf16.msra.mxu0 0
    %872 = vmatprep.subr.bf16.mxu0 0
    %873 = vmatpush1.bf16.msra.mxu0 0
    %874 = vmatprep.subr.bf16.mxu0 0
    %875 = vmatpush1.bf16.msra.mxu0 0
    %876 = vmatprep.subr.bf16.mxu0 0
    %877 = vmatpush1.bf16.msra.mxu0 0
    %878 = vmatprep.subr.bf16.mxu0 0
    %879 = vmatpush1.bf16.msra.mxu0 0
    %880 = vmatprep.subr.bf16.mxu0 0
    %881 = vmatpush1.bf16.msra.mxu0 0
    %882 = vmatprep.subr.bf16.mxu0 0
    %883 = vmatpush1.bf16.msra.mxu0 0
    %884 = vmatprep.subr.bf16.mxu0 0
    %885 = vmatpush1.bf16.msra.mxu0 0
    %886 = vmatprep.subr.bf16.mxu0 0
    %887 = vmatpush1.bf16.msra.mxu0 0
    %888 = vmatprep.mubr.bf16.mxu0 0
    %889 = vmatmul.mubr.bf16.gmra.mrb[0].mxu0 %v851
    %v890 = vpop.f32.mrb[0].mxu0
    %v891 = vadd.f32 0.0, %v890
    %v892 = vpop.f32.mrb[0].mxu0
    %v893 = vpop.f32.mrb[0].mxu0
    %v894 = vpop.f32.mrb[0].mxu0
    %895 = vdwg.mxu0
    %v896 = vadd.f32 %v735, %v891
    %897 = vrot.lane.b32.xlu0 %v423, 104
    %v898 = vpop.permute.xlu0 %897
    %899 = vrot.lane.b32.xlu0 %v419, 104
    %v900 = vpop.permute.xlu0 %899
    %v902 = vsel %vm429, %v898, 0
    %v905 = vsel %vm429, %v900, 0
    %907 = vmatprep.subr.bf16.mxu0 0
    %908 = vmatpush1.bf16.xpose.msra.mxu0 %v905
    %909 = vmatprep.subr.bf16.mxu0 0
    %910 = vmatpush1.bf16.xpose.msra.mxu0 0
    %911 = vmatprep.subr.bf16.mxu0 0
    %912 = vmatpush1.bf16.xpose.msra.mxu0 0
    %913 = vmatprep.subr.bf16.mxu0 0
    %914 = vmatpush1.bf16.xpose.msra.mxu0 0
    %915 = vmatprep.subr.bf16.mxu0 0
    %916 = vmatpush1.bf16.xpose.msra.mxu0 0
    %917 = vmatprep.subr.bf16.mxu0 0
    %918 = vmatpush1.bf16.xpose.msra.mxu0 0
    %919 = vmatprep.subr.bf16.mxu0 0
    %920 = vmatpush1.bf16.xpose.msra.mxu0 0
    %921 = vmatprep.subr.bf16.mxu0 0
    %922 = vmatpush1.bf16.xpose.msra.mxu0 0
    %923 = vmatprep.subr.bf16.mxu0 0
    %924 = vmatpush1.bf16.xpose.msra.mxu0 0
    %925 = vmatprep.subr.bf16.mxu0 0
    %926 = vmatpush1.bf16.xpose.msra.mxu0 0
    %927 = vmatprep.subr.bf16.mxu0 0
    %928 = vmatpush1.bf16.xpose.msra.mxu0 0
    %929 = vmatprep.subr.bf16.mxu0 0
    %930 = vmatpush1.bf16.xpose.msra.mxu0 0
    %931 = vmatprep.subr.bf16.mxu0 0
    %932 = vmatpush1.bf16.xpose.msra.mxu0 0
    %933 = vmatprep.subr.bf16.mxu0 0
    %934 = vmatpush1.bf16.xpose.msra.mxu0 0
    %935 = vmatprep.subr.bf16.mxu0 0
    %936 = vmatpush1.bf16.xpose.msra.mxu0 0
    %937 = vmatprep.subr.bf16.mxu0 0
    %938 = vmatpush1.bf16.xpose.msra.mxu0 0
    %939 = vmatprep.mubr.bf16.mxu0 0
    %940 = vmatmul.mubr.bf16.gmra.mrb[0].mxu0 %v902
    %v941 = vpop.f32.mrb[0].mxu0
    %v942 = vadd.f32 %v428, %v941
    %v943 = vpop.f32.mrb[0].mxu0
    %v944 = vpop.f32.mrb[0].mxu0
    %v945 = vpop.f32.mrb[0].mxu0
    %946 = vdwg.mxu0
    %v947 = vsel %vm476, %v942, -inf
    %948 = vmax.xlane.f32.xlu0 %v947
    %v949 = vpop.xlane.xlu0 %948
    %v950 = vsub.f32 %v942, %v949
    %v951 = vmul.f32 %v950, 1.442695
    %v952 = vpow.pop %v951
    %v953 = vsel %vm476, %v952, 0.0
    %954 = vadd.xlane.f32.xlu0 %v953
    %v955 = vpop.xlane.xlu0 %954
    %v956 = vrcp.pop %v955
    %v957 = vmul.f32 %v952, %v956
    %v958 = vpack.c.bf16 %v957, %v957
    %959 = vrot.lane.b32.xlu0 %v421, 104
    %v960 = vpop.permute.xlu0 %959
    %v963 = vsel %vm476, %v958, 0
    %965 = vmatprep.subr.bf16.mxu0 0
    %966 = vmatpush1.bf16.msra.mxu0 %v960
    %967 = vmatprep.subr.bf16.mxu0 0
    %968 = vmatpush1.bf16.msra.mxu0 0
    %969 = vmatprep.subr.bf16.mxu0 0
    %970 = vmatpush1.bf16.msra.mxu0 0
    %971 = vmatprep.subr.bf16.mxu0 0
    %972 = vmatpush1.bf16.msra.mxu0 0
    %973 = vmatprep.subr.bf16.mxu0 0
    %974 = vmatpush1.bf16.msra.mxu0 0
    %975 = vmatprep.subr.bf16.mxu0 0
    %976 = vmatpush1.bf16.msra.mxu0 0
    %977 = vmatprep.subr.bf16.mxu0 0
    %978 = vmatpush1.bf16.msra.mxu0 0
    %979 = vmatprep.subr.bf16.mxu0 0
    %980 = vmatpush1.bf16.msra.mxu0 0
    %981 = vmatprep.subr.bf16.mxu0 0
    %982 = vmatpush1.bf16.msra.mxu0 0
    %983 = vmatprep.subr.bf16.mxu0 0
    %984 = vmatpush1.bf16.msra.mxu0 0
    %985 = vmatprep.subr.bf16.mxu0 0
    %986 = vmatpush1.bf16.msra.mxu0 0
    %987 = vmatprep.subr.bf16.mxu0 0
    %988 = vmatpush1.bf16.msra.mxu0 0
    %989 = vmatprep.subr.bf16.mxu0 0
    %990 = vmatpush1.bf16.msra.mxu0 0
    %991 = vmatprep.subr.bf16.mxu0 0
    %992 = vmatpush1.bf16.msra.mxu0 0
    %993 = vmatprep.subr.bf16.mxu0 0
    %994 = vmatpush1.bf16.msra.mxu0 0
    %995 = vmatprep.subr.bf16.mxu0 0
    %996 = vmatpush1.bf16.msra.mxu0 0
    %997 = vmatprep.mubr.bf16.mxu0 0
    %998 = vmatmul.mubr.bf16.gmra.mrb[0].mxu0 %v963
    %v999 = vpop.f32.mrb[0].mxu0
    %v1000 = vadd.f32 0.0, %v999
    %v1001 = vpop.f32.mrb[0].mxu0
    %v1002 = vpop.f32.mrb[0].mxu0
    %v1003 = vpop.f32.mrb[0].mxu0
    %1004 = vdwg.mxu0
    %v1005 = vpack.c.bf16 %v1000, %v1000
    %v1006 = vld [vmem:[#allocation10 + $0xc] sm:$0xf]
    %v1008 = vsel %vm429, %v1005, 0
    %v1011 = vsel %vm650, %v1006, 0
    %1013 = vmatprep.subr.bf16.mxu0 0
    %1014 = vmatpush1.bf16.msra.mxu0 %v1011
    %1015 = vmatprep.subr.bf16.mxu0 0
    %1016 = vmatpush1.bf16.msra.mxu0 0
    %1017 = vmatprep.subr.bf16.mxu0 0
    %1018 = vmatpush1.bf16.msra.mxu0 0
    %1019 = vmatprep.subr.bf16.mxu0 0
    %1020 = vmatpush1.bf16.msra.mxu0 0
    %1021 = vmatprep.subr.bf16.mxu0 0
    %1022 = vmatpush1.bf16.msra.mxu0 0
    %1023 = vmatprep.subr.bf16.mxu0 0
    %1024 = vmatpush1.bf16.msra.mxu0 0
    %1025 = vmatprep.subr.bf16.mxu0 0
    %1026 = vmatpush1.bf16.msra.mxu0 0
    %1027 = vmatprep.subr.bf16.mxu0 0
    %1028 = vmatpush1.bf16.msra.mxu0 0
    %1029 = vmatprep.subr.bf16.mxu0 0
    %1030 = vmatpush1.bf16.msra.mxu0 0
    %1031 = vmatprep.subr.bf16.mxu0 0
    %1032 = vmatpush1.bf16.msra.mxu0 0
    %1033 = vmatprep.subr.bf16.mxu0 0
    %1034 = vmatpush1.bf16.msra.mxu0 0
    %1035 = vmatprep.subr.bf16.mxu0 0
    %1036 = vmatpush1.bf16.msra.mxu0 0
    %1037 = vmatprep.subr.bf16.mxu0 0
    %1038 = vmatpush1.bf16.msra.mxu0 0
    %1039 = vmatprep.subr.bf16.mxu0 0
    %1040 = vmatpush1.bf16.msra.mxu0 0
    %1041 = vmatprep.subr.bf16.mxu0 0
    %1042 = vmatpush1.bf16.msra.mxu0 0
    %1043 = vmatprep.subr.bf16.mxu0 0
    %1044 = vmatpush1.bf16.msra.mxu0 0
    %1045 = vmatprep.mubr.bf16.mxu0 0
    %1046 = vmatmul.mubr.bf16.gmra.mrb[0].mxu0 %v1008
    %v1047 = vpop.f32.mrb[0].mxu0
    %v1048 = vadd.f32 0.0, %v1047
    %v1049 = vpop.f32.mrb[0].mxu0
    %v1050 = vpop.f32.mrb[0].mxu0
    %v1051 = vpop.f32.mrb[0].mxu0
    %1052 = vdwg.mxu0
    %v1053 = vadd.f32 %v896, %v1048
    %v1054 = vld [vmem:[#allocation11] sm:$0xff]
    %v1055 = vadd.f32 %v1054, %v1053
    %1056 = vst [vmem:[#allocation11] sm:$0xff] %v1055
    %v1057 = vlaneseq
    %v1058 = vshrl.u32 %v1057, 7
    %v1059 = vsub.s32 1, %v1058
    %v1060 = vrot.slane %v424, %v1059
    %v1061 = vrot.slane %v423, 4
    %v1063 = vsel %vm429, %v1061, 0
    %v1066 = vsel %vm429, %v420, 0
    %1068 = vmatprep.subr.bf16.mxu0 0
    %1069 = vmatpush1.bf16.xpose.msra.mxu0 %v1066
    %1070 = vmatprep.subr.bf16.mxu0 0
    %1071 = vmatpush1.bf16.xpose.msra.mxu0 0
    %1072 = vmatprep.subr.bf16.mxu0 0
    %1073 = vmatpush1.bf16.xpose.msra.mxu0 0
    %1074 = vmatprep.subr.bf16.mxu0 0
    %1075 = vmatpush1.bf16.xpose.msra.mxu0 0
    %1076 = vmatprep.subr.bf16.mxu0 0
    %1077 = vmatpush1.bf16.xpose.msra.mxu0 0
    %1078 = vmatprep.subr.bf16.mxu0 0
    %1079 = vmatpush1.bf16.xpose.msra.mxu0 0
    %1080 = vmatprep.subr.bf16.mxu0 0
    %1081 = vmatpush1.bf16.xpose.msra.mxu0 0
    %1082 = vmatprep.subr.bf16.mxu0 0
    %1083 = vmatpush1.bf16.xpose.msra.mxu0 0
    %1084 = vmatprep.subr.bf16.mxu0 0
    %1085 = vmatpush1.bf16.xpose.msra.mxu0 0
    %1086 = vmatprep.subr.bf16.mxu0 0
    %1087 = vmatpush1.bf16.xpose.msra.mxu0 0
    %1088 = vmatprep.subr.bf16.mxu0 0
    %1089 = vmatpush1.bf16.xpose.msra.mxu0 0
    %1090 = vmatprep.subr.bf16.mxu0 0
    %1091 = vmatpush1.bf16.xpose.msra.mxu0 0
    %1092 = vmatprep.subr.bf16.mxu0 0
    %1093 = vmatpush1.bf16.xpose.msra.mxu0 0
    %1094 = vmatprep.subr.bf16.mxu0 0
    %1095 = vmatpush1.bf16.xpose.msra.mxu0 0
    %1096 = vmatprep.subr.bf16.mxu0 0
    %1097 = vmatpush1.bf16.xpose.msra.mxu0 0
    %1098 = vmatprep.subr.bf16.mxu0 0
    %1099 = vmatpush1.bf16.xpose.msra.mxu0 0
    %1100 = vmatprep.mubr.bf16.mxu0 0
    %1101 = vmatmul.mubr.bf16.gmra.mrb[0].mxu0 %v1063
    %v1102 = vpop.f32.mrb[0].mxu0
    %v1103 = vadd.f32 %v1060, %v1102
    %v1104 = vpop.f32.mrb[0].mxu0
    %v1105 = vpop.f32.mrb[0].mxu0
    %v1106 = vpop.f32.mrb[0].mxu0
    %1107 = vdwg.mxu0
    %v1108 = vsel %vm476, %v1103, -inf
    %1109 = vmax.xlane.f32.xlu0 %v1108
    %v1110 = vpop.xlane.xlu0 %1109
    %v1111 = vsub.f32 %v1103, %v1110
    %v1112 = vmul.f32 %v1111, 1.442695
    %v1113 = vpow.pop %v1112
    %v1114 = vsel %vm476, %v1113, 0.0
    %1115 = vadd.xlane.f32.xlu0 %v1114
    %v1116 = vpop.xlane.xlu0 %1115
    %v1117 = vrcp.pop %v1116
    %v1118 = vmul.f32 %v1113, %v1117
    %v1119 = vpack.c.bf16 %v1118, %v1118
    %v1121 = vsel %vm476, %v1119, 0
    %1123 = vmatprep.subr.bf16.mxu0 0
    %1124 = vmatpush1.bf16.msra.mxu0 %v422
    %1125 = vmatprep.subr.bf16.mxu0 0
    %1126 = vmatpush1.bf16.msra.mxu0 0
    %1127 = vmatprep.subr.bf16.mxu0 0
    %1128 = vmatpush1.bf16.msra.mxu0 0
    %1129 = vmatprep.subr.bf16.mxu0 0
    %1130 = vmatpush1.bf16.msra.mxu0 0
    %1131 = vmatprep.subr.bf16.mxu0 0
    %1132 = vmatpush1.bf16.msra.mxu0 0
    %1133 = vmatprep.subr.bf16.mxu0 0
    %1134 = vmatpush1.bf16.msra.mxu0 0
    %1135 = vmatprep.subr.bf16.mxu0 0
    %1136 = vmatpush1.bf16.msra.mxu0 0
    %1137 = vmatprep.subr.bf16.mxu0 0
    %1138 = vmatpush1.bf16.msra.mxu0 0
    %1139 = vmatprep.subr.bf16.mxu0 0
    %1140 = vmatpush1.bf16.msra.mxu0 0
    %1141 = vmatprep.subr.bf16.mxu0 0
    %1142 = vmatpush1.bf16.msra.mxu0 0
    %1143 = vmatprep.subr.bf16.mxu0 0
    %1144 = vmatpush1.bf16.msra.mxu0 0
    %1145 = vmatprep.subr.bf16.mxu0 0
    %1146 = vmatpush1.bf16.msra.mxu0 0
    %1147 = vmatprep.subr.bf16.mxu0 0
    %1148 = vmatpush1.bf16.msra.mxu0 0
    %1149 = vmatprep.subr.bf16.mxu0 0
    %1150 = vmatpush1.bf16.msra.mxu0 0
    %1151 = vmatprep.subr.bf16.mxu0 0
    %1152 = vmatpush1.bf16.msra.mxu0 0
    %1153 = vmatprep.subr.bf16.mxu0 0
    %1154 = vmatpush1.bf16.msra.mxu0 0
    %1155 = vmatprep.mubr.bf16.mxu0 0
    %1156 = vmatmul.mubr.bf16.gmra.mrb[0].mxu0 %v1121
    %v1157 = vpop.f32.mrb[0].mxu0
    %v1158 = vadd.f32 0.0, %v1157
    %v1159 = vpop.f32.mrb[0].mxu0
    %v1160 = vpop.f32.mrb[0].mxu0
    %v1161 = vpop.f32.mrb[0].mxu0
    %1162 = vdwg.mxu0
    %v1163 = vpack.c.bf16 %v1158, %v1158
    %v1164 = vld [vmem:[#allocation10] sm:$0xf]
    %1165 = vrot.lane.b32.xlu0 %v1061, 120
    %v1166 = vpop.permute.xlu0 %1165
    %1168 = vrot.lane.b32.xlu0 %v420, 120
    %v1169 = vpop.permute.xlu0 %1168
    %v1171 = vsel %vm429, %v1166, 0
    %v1174 = vsel %vm429, %v1169, 0
    %1176 = vmatprep.subr.bf16.mxu0 0
    %1177 = vmatpush1.bf16.xpose.msra.mxu0 %v1174
    %1178 = vmatprep.subr.bf16.mxu0 0
    %1179 = vmatpush1.bf16.xpose.msra.mxu0 0
    %1180 = vmatprep.subr.bf16.mxu0 0
    %1181 = vmatpush1.bf16.xpose.msra.mxu0 0
    %1182 = vmatprep.subr.bf16.mxu0 0
    %1183 = vmatpush1.bf16.xpose.msra.mxu0 0
    %1184 = vmatprep.subr.bf16.mxu0 0
    %1185 = vmatpush1.bf16.xpose.msra.mxu0 0
    %1186 = vmatprep.subr.bf16.mxu0 0
    %1187 = vmatpush1.bf16.xpose.msra.mxu0 0
    %1188 = vmatprep.subr.bf16.mxu0 0
    %1189 = vmatpush1.bf16.xpose.msra.mxu0 0
    %1190 = vmatprep.subr.bf16.mxu0 0
    %1191 = vmatpush1.bf16.xpose.msra.mxu0 0
    %1192 = vmatprep.subr.bf16.mxu0 0
    %1193 = vmatpush1.bf16.xpose.msra.mxu0 0
    %1194 = vmatprep.subr.bf16.mxu0 0
    %1195 = vmatpush1.bf16.xpose.msra.mxu0 0
    %1196 = vmatprep.subr.bf16.mxu0 0
    %1197 = vmatpush1.bf16.xpose.msra.mxu0 0
    %1198 = vmatprep.subr.bf16.mxu0 0
    %1199 = vmatpush1.bf16.xpose.msra.mxu0 0
    %1200 = vmatprep.subr.bf16.mxu0 0
    %1201 = vmatpush1.bf16.xpose.msra.mxu0 0
    %1202 = vmatprep.subr.bf16.mxu0 0
    %1203 = vmatpush1.bf16.xpose.msra.mxu0 0
    %1204 = vmatprep.subr.bf16.mxu0 0
    %1205 = vmatpush1.bf16.xpose.msra.mxu0 0
    %1206 = vmatprep.subr.bf16.mxu0 0
    %1207 = vmatpush1.bf16.xpose.msra.mxu0 0
    %1208 = vmatprep.mubr.bf16.mxu0 0
    %1209 = vmatmul.mubr.bf16.gmra.mrb[0].mxu0 %v1171
    %v1210 = vpop.f32.mrb[0].mxu0
    %v1211 = vadd.f32 %v1060, %v1210
    %v1212 = vpop.f32.mrb[0].mxu0
    %v1213 = vpop.f32.mrb[0].mxu0
    %v1214 = vpop.f32.mrb[0].mxu0
    %1215 = vdwg.mxu0
    %v1216 = vsel %vm476, %v1211, -inf
    %1217 = vmax.xlane.f32.xlu0 %v1216
    %v1218 = vpop.xlane.xlu0 %1217
    %v1219 = vsub.f32 %v1211, %v1218
    %v1220 = vmul.f32 %v1219, 1.442695
    %v1221 = vpow.pop %v1220
    %v1222 = vsel %vm476, %v1221, 0.0
    %1223 = vadd.xlane.f32.xlu0 %v1222
    %v1224 = vpop.xlane.xlu0 %1223
    %v1225 = vrcp.pop %v1224
    %v1226 = vmul.f32 %v1221, %v1225
    %v1227 = vpack.c.bf16 %v1226, %v1226
    %1229 = vrot.lane.b32.xlu0 %v422, 120
    %v1230 = vpop.permute.xlu0 %1229
    %v1233 = vsel %vm476, %v1227, 0
    %1235 = vmatprep.subr.bf16.mxu0 0
    %1236 = vmatpush1.bf16.msra.mxu0 %v1230
    %1237 = vmatprep.subr.bf16.mxu0 0
    %1238 = vmatpush1.bf16.msra.mxu0 0
    %1239 = vmatprep.subr.bf16.mxu0 0
    %1240 = vmatpush1.bf16.msra.mxu0 0
    %1241 = vmatprep.subr.bf16.mxu0 0
    %1242 = vmatpush1.bf16.msra.mxu0 0
    %1243 = vmatprep.subr.bf16.mxu0 0
    %1244 = vmatpush1.bf16.msra.mxu0 0
    %1245 = vmatprep.subr.bf16.mxu0 0
    %1246 = vmatpush1.bf16.msra.mxu0 0
    %1247 = vmatprep.subr.bf16.mxu0 0
    %1248 = vmatpush1.bf16.msra.mxu0 0
    %1249 = vmatprep.subr.bf16.mxu0 0
    %1250 = vmatpush1.bf16.msra.mxu0 0
    %1251 = vmatprep.subr.bf16.mxu0 0
    %1252 = vmatpush1.bf16.msra.mxu0 0
    %1253 = vmatprep.subr.bf16.mxu0 0
    %1254 = vmatpush1.bf16.msra.mxu0 0
    %1255 = vmatprep.subr.bf16.mxu0 0
    %1256 = vmatpush1.bf16.msra.mxu0 0
    %1257 = vmatprep.subr.bf16.mxu0 0
    %1258 = vmatpush1.bf16.msra.mxu0 0
    %1259 = vmatprep.subr.bf16.mxu0 0
    %1260 = vmatpush1.bf16.msra.mxu0 0
    %1261 = vmatprep.subr.bf16.mxu0 0
    %1262 = vmatpush1.bf16.msra.mxu0 0
    %1263 = vmatprep.subr.bf16.mxu0 0
    %1264 = vmatpush1.bf16.msra.mxu0 0
    %1265 = vmatprep.subr.bf16.mxu0 0
    %1266 = vmatpush1.bf16.msra.mxu0 0
    %1267 = vmatprep.mubr.bf16.mxu0 0
    %1268 = vmatmul.mubr.bf16.gmra.mrb[0].mxu0 %v1233
    %v1269 = vpop.f32.mrb[0].mxu0
    %v1270 = vadd.f32 0.0, %v1269
    %v1271 = vpop.f32.mrb[0].mxu0
    %v1272 = vpop.f32.mrb[0].mxu0
    %v1273 = vpop.f32.mrb[0].mxu0
    %1274 = vdwg.mxu0
    %v1275 = vpack.c.bf16 %v1270, %v1270
    %v1276 = vld [vmem:[#allocation10 + $0x4] sm:$0xf]
    %v1278 = vsel %vm429, %v1275, 0
    %v1281 = vsel %vm650, %v1276, 0
    %1283 = vmatprep.subr.bf16.mxu0 0
    %1284 = vmatpush1.bf16.msra.mxu0 %v1281
    %1285 = vmatprep.subr.bf16.mxu0 0
    %1286 = vmatpush1.bf16.msra.mxu0 0
    %1287 = vmatprep.subr.bf16.mxu0 0
    %1288 = vmatpush1.bf16.msra.mxu0 0
    %1289 = vmatprep.subr.bf16.mxu0 0
    %1290 = vmatpush1.bf16.msra.mxu0 0
    %1291 = vmatprep.subr.bf16.mxu0 0
    %1292 = vmatpush1.bf16.msra.mxu0 0
    %1293 = vmatprep.subr.bf16.mxu0 0
    %1294 = vmatpush1.bf16.msra.mxu0 0
    %1295 = vmatprep.subr.bf16.mxu0 0
    %1296 = vmatpush1.bf16.msra.mxu0 0
    %1297 = vmatprep.subr.bf16.mxu0 0
    %1298 = vmatpush1.bf16.msra.mxu0 0
    %1299 = vmatprep.subr.bf16.mxu0 0
    %1300 = vmatpush1.bf16.msra.mxu0 0
    %1301 = vmatprep.subr.bf16.mxu0 0
    %1302 = vmatpush1.bf16.msra.mxu0 0
    %1303 = vmatprep.subr.bf16.mxu0 0
    %1304 = vmatpush1.bf16.msra.mxu0 0
    %1305 = vmatprep.subr.bf16.mxu0 0
    %1306 = vmatpush1.bf16.msra.mxu0 0
    %1307 = vmatprep.subr.bf16.mxu0 0
    %1308 = vmatpush1.bf16.msra.mxu0 0
    %1309 = vmatprep.subr.bf16.mxu0 0
    %1310 = vmatpush1.bf16.msra.mxu0 0
    %1311 = vmatprep.subr.bf16.mxu0 0
    %1312 = vmatpush1.bf16.msra.mxu0 0
    %1313 = vmatprep.subr.bf16.mxu0 0
    %1314 = vmatpush1.bf16.msra.mxu0 0
    %1315 = vmatprep.mubr.bf16.mxu0 0
    %1316 = vmatmul.mubr.bf16.gmra.mrb[0].mxu0 %v1278
    %v1317 = vpop.f32.mrb[0].mxu0
    %v1318 = vadd.f32 0.0, %v1317
    %v1319 = vpop.f32.mrb[0].mxu0
    %v1320 = vpop.f32.mrb[0].mxu0
    %v1321 = vpop.f32.mrb[0].mxu0
    %1322 = vdwg.mxu0
    %v1324 = vsel %vm429, %v1163, 0
    %v1327 = vsel %vm650, %v1164, 0
    %1329 = vmatprep.subr.bf16.mxu0 0
    %1330 = vmatpush1.bf16.msra.mxu0 %v1327
    %1331 = vmatprep.subr.bf16.mxu0 0
    %1332 = vmatpush1.bf16.msra.mxu0 0
    %1333 = vmatprep.subr.bf16.mxu0 0
    %1334 = vmatpush1.bf16.msra.mxu0 0
    %1335 = vmatprep.subr.bf16.mxu0 0
    %1336 = vmatpush1.bf16.msra.mxu0 0
    %1337 = vmatprep.subr.bf16.mxu0 0
    %1338 = vmatpush1.bf16.msra.mxu0 0
    %1339 = vmatprep.subr.bf16.mxu0 0
    %1340 = vmatpush1.bf16.msra.mxu0 0
    %1341 = vmatprep.subr.bf16.mxu0 0
    %1342 = vmatpush1.bf16.msra.mxu0 0
    %1343 = vmatprep.subr.bf16.mxu0 0
    %1344 = vmatpush1.bf16.msra.mxu0 0
    %1345 = vmatprep.subr.bf16.mxu0 0
    %1346 = vmatpush1.bf16.msra.mxu0 0
    %1347 = vmatprep.subr.bf16.mxu0 0
    %1348 = vmatpush1.bf16.msra.mxu0 0
    %1349 = vmatprep.subr.bf16.mxu0 0
    %1350 = vmatpush1.bf16.msra.mxu0 0
    %1351 = vmatprep.subr.bf16.mxu0 0
    %1352 = vmatpush1.bf16.msra.mxu0 0
    %1353 = vmatprep.subr.bf16.mxu0 0
    %1354 = vmatpush1.bf16.msra.mxu0 0
    %1355 = vmatprep.subr.bf16.mxu0 0
    %1356 = vmatpush1.bf16.msra.mxu0 0
    %1357 = vmatprep.subr.bf16.mxu0 0
    %1358 = vmatpush1.bf16.msra.mxu0 0
    %1359 = vmatprep.subr.bf16.mxu0 0
    %1360 = vmatpush1.bf16.msra.mxu0 0
    %1361 = vmatprep.mubr.bf16.mxu0 0
    %1362 = vmatmul.mubr.bf16.gmra.mrb[0].mxu0 %v1324
    %v1363 = vpop.f32.mrb[0].mxu0
    %v1364 = vadd.f32 %v1318, %v1363
    %v1365 = vpop.f32.mrb[0].mxu0
    %v1366 = vpop.f32.mrb[0].mxu0
    %v1367 = vpop.f32.mrb[0].mxu0
    %1368 = vdwg.mxu0
    %1369 = vrot.lane.b32.xlu0 %v1061, 112
    %v1370 = vpop.permute.xlu0 %1369
    %1371 = vrot.lane.b32.xlu0 %v420, 112
    %v1372 = vpop.permute.xlu0 %1371
    %v1374 = vsel %vm429, %v1370, 0
    %v1377 = vsel %vm429, %v1372, 0
    %1379 = vmatprep.subr.bf16.mxu0 0
    %1380 = vmatpush1.bf16.xpose.msra.mxu0 %v1377
    %1381 = vmatprep.subr.bf16.mxu0 0
    %1382 = vmatpush1.bf16.xpose.msra.mxu0 0
    %1383 = vmatprep.subr.bf16.mxu0 0
    %1384 = vmatpush1.bf16.xpose.msra.mxu0 0
    %1385 = vmatprep.subr.bf16.mxu0 0
    %1386 = vmatpush1.bf16.xpose.msra.mxu0 0
    %1387 = vmatprep.subr.bf16.mxu0 0
    %1388 = vmatpush1.bf16.xpose.msra.mxu0 0
    %1389 = vmatprep.subr.bf16.mxu0 0
    %1390 = vmatpush1.bf16.xpose.msra.mxu0 0
    %1391 = vmatprep.subr.bf16.mxu0 0
    %1392 = vmatpush1.bf16.xpose.msra.mxu0 0
    %1393 = vmatprep.subr.bf16.mxu0 0
    %1394 = vmatpush1.bf16.xpose.msra.mxu0 0
    %1395 = vmatprep.subr.bf16.mxu0 0
    %1396 = vmatpush1.bf16.xpose.msra.mxu0 0
    %1397 = vmatprep.subr.bf16.mxu0 0
    %1398 = vmatpush1.bf16.xpose.msra.mxu0 0
    %1399 = vmatprep.subr.bf16.mxu0 0
    %1400 = vmatpush1.bf16.xpose.msra.mxu0 0
    %1401 = vmatprep.subr.bf16.mxu0 0
    %1402 = vmatpush1.bf16.xpose.msra.mxu0 0
    %1403 = vmatprep.subr.bf16.mxu0 0
    %1404 = vmatpush1.bf16.xpose.msra.mxu0 0
    %1405 = vmatprep.subr.bf16.mxu0 0
    %1406 = vmatpush1.bf16.xpose.msra.mxu0 0
    %1407 = vmatprep.subr.bf16.mxu0 0
    %1408 = vmatpush1.bf16.xpose.msra.mxu0 0
    %1409 = vmatprep.subr.bf16.mxu0 0
    %1410 = vmatpush1.bf16.xpose.msra.mxu0 0
    %1411 = vmatprep.mubr.bf16.mxu0 0
    %1412 = vmatmul.mubr.bf16.gmra.mrb[0].mxu0 %v1374
    %v1413 = vpop.f32.mrb[0].mxu0
    %v1414 = vadd.f32 %v1060, %v1413
    %v1415 = vpop.f32.mrb[0].mxu0
    %v1416 = vpop.f32.mrb[0].mxu0
    %v1417 = vpop.f32.mrb[0].mxu0
    %1418 = vdwg.mxu0
    %v1419 = vsel %vm476, %v1414, -inf
    %1420 = vmax.xlane.f32.xlu0 %v1419
    %v1421 = vpop.xlane.xlu0 %1420
    %v1422 = vsub.f32 %v1414, %v1421
    %v1423 = vmul.f32 %v1422, 1.442695
    %v1424 = vpow.pop %v1423
    %v1425 = vsel %vm476, %v1424, 0.0
    %1426 = vadd.xlane.f32.xlu0 %v1425
    %v1427 = vpop.xlane.xlu0 %1426
    %v1428 = vrcp.pop %v1427
    %v1429 = vmul.f32 %v1424, %v1428
    %v1430 = vpack.c.bf16 %v1429, %v1429
    %1431 = vrot.lane.b32.xlu0 %v422, 112
    %v1432 = vpop.permute.xlu0 %1431
    %v1435 = vsel %vm476, %v1430, 0
    %1437 = vmatprep.subr.bf16.mxu0 0
    %1438 = vmatpush1.bf16.msra.mxu0 %v1432
    %1439 = vmatprep.subr.bf16.mxu0 0
    %1440 = vmatpush1.bf16.msra.mxu0 0
    %1441 = vmatprep.subr.bf16.mxu0 0
    %1442 = vmatpush1.bf16.msra.mxu0 0
    %1443 = vmatprep.subr.bf16.mxu0 0
    %1444 = vmatpush1.bf16.msra.mxu0 0
    %1445 = vmatprep.subr.bf16.mxu0 0
    %1446 = vmatpush1.bf16.msra.mxu0 0
    %1447 = vmatprep.subr.bf16.mxu0 0
    %1448 = vmatpush1.bf16.msra.mxu0 0
    %1449 = vmatprep.subr.bf16.mxu0 0
    %1450 = vmatpush1.bf16.msra.mxu0 0
    %1451 = vmatprep.subr.bf16.mxu0 0
    %1452 = vmatpush1.bf16.msra.mxu0 0
    %1453 = vmatprep.subr.bf16.mxu0 0
    %1454 = vmatpush1.bf16.msra.mxu0 0
    %1455 = vmatprep.subr.bf16.mxu0 0
    %1456 = vmatpush1.bf16.msra.mxu0 0
    %1457 = vmatprep.subr.bf16.mxu0 0
    %1458 = vmatpush1.bf16.msra.mxu0 0
    %1459 = vmatprep.subr.bf16.mxu0 0
    %1460 = vmatpush1.bf16.msra.mxu0 0
    %1461 = vmatprep.subr.bf16.mxu0 0
    %1462 = vmatpush1.bf16.msra.mxu0 0
    %1463 = vmatprep.subr.bf16.mxu0 0
    %1464 = vmatpush1.bf16.msra.mxu0 0
    %1465 = vmatprep.subr.bf16.mxu0 0
    %1466 = vmatpush1.bf16.msra.mxu0 0
    %1467 = vmatprep.subr.bf16.mxu0 0
    %1468 = vmatpush1.bf16.msra.mxu0 0
    %1469 = vmatprep.mubr.bf16.mxu0 0
    %1470 = vmatmul.mubr.bf16.gmra.mrb[0].mxu0 %v1435
    %v1471 = vpop.f32.mrb[0].mxu0
    %v1472 = vadd.f32 0.0, %v1471
    %v1473 = vpop.f32.mrb[0].mxu0
    %v1474 = vpop.f32.mrb[0].mxu0
    %v1475 = vpop.f32.mrb[0].mxu0
    %1476 = vdwg.mxu0
    %v1477 = vpack.c.bf16 %v1472, %v1472
    %v1478 = vld [vmem:[#allocation10 + $0x8] sm:$0xf]
    %v1480 = vsel %vm429, %v1477, 0
    %v1483 = vsel %vm650, %v1478, 0
    %1485 = vmatprep.subr.bf16.mxu0 0
    %1486 = vmatpush1.bf16.msra.mxu0 %v1483
    %1487 = vmatprep.subr.bf16.mxu0 0
    %1488 = vmatpush1.bf16.msra.mxu0 0
    %1489 = vmatprep.subr.bf16.mxu0 0
    %1490 = vmatpush1.bf16.msra.mxu0 0
    %1491 = vmatprep.subr.bf16.mxu0 0
    %1492 = vmatpush1.bf16.msra.mxu0 0
    %1493 = vmatprep.subr.bf16.mxu0 0
    %1494 = vmatpush1.bf16.msra.mxu0 0
    %1495 = vmatprep.subr.bf16.mxu0 0
    %1496 = vmatpush1.bf16.msra.mxu0 0
    %1497 = vmatprep.subr.bf16.mxu0 0
    %1498 = vmatpush1.bf16.msra.mxu0 0
    %1499 = vmatprep.subr.bf16.mxu0 0
    %1500 = vmatpush1.bf16.msra.mxu0 0
    %1501 = vmatprep.subr.bf16.mxu0 0
    %1502 = vmatpush1.bf16.msra.mxu0 0
    %1503 = vmatprep.subr.bf16.mxu0 0
    %1504 = vmatpush1.bf16.msra.mxu0 0
    %1505 = vmatprep.subr.bf16.mxu0 0
    %1506 = vmatpush1.bf16.msra.mxu0 0
    %1507 = vmatprep.subr.bf16.mxu0 0
    %1508 = vmatpush1.bf16.msra.mxu0 0
    %1509 = vmatprep.subr.bf16.mxu0 0
    %1510 = vmatpush1.bf16.msra.mxu0 0
    %1511 = vmatprep.subr.bf16.mxu0 0
    %1512 = vmatpush1.bf16.msra.mxu0 0
    %1513 = vmatprep.subr.bf16.mxu0 0
    %1514 = vmatpush1.bf16.msra.mxu0 0
    %1515 = vmatprep.subr.bf16.mxu0 0
    %1516 = vmatpush1.bf16.msra.mxu0 0
    %1517 = vmatprep.mubr.bf16.mxu0 0
    %1518 = vmatmul.mubr.bf16.gmra.mrb[0].mxu0 %v1480
    %v1519 = vpop.f32.mrb[0].mxu0
    %v1520 = vadd.f32 0.0, %v1519
    %v1521 = vpop.f32.mrb[0].mxu0
    %v1522 = vpop.f32.mrb[0].mxu0
    %v1523 = vpop.f32.mrb[0].mxu0
    %1524 = vdwg.mxu0
    %v1525 = vadd.f32 %v1364, %v1520
    %1526 = vrot.lane.b32.xlu0 %v1061, 104
    %v1527 = vpop.permute.xlu0 %1526
    %1528 = vrot.lane.b32.xlu0 %v420, 104
    %v1529 = vpop.permute.xlu0 %1528
    %v1531 = vsel %vm429, %v1527, 0
    %v1534 = vsel %vm429, %v1529, 0
    %1536 = vmatprep.subr.bf16.mxu0 0
    %1537 = vmatpush1.bf16.xpose.msra.mxu0 %v1534
    %1538 = vmatprep.subr.bf16.mxu0 0
    %1539 = vmatpush1.bf16.xpose.msra.mxu0 0
    %1540 = vmatprep.subr.bf16.mxu0 0
    %1541 = vmatpush1.bf16.xpose.msra.mxu0 0
    %1542 = vmatprep.subr.bf16.mxu0 0
    %1543 = vmatpush1.bf16.xpose.msra.mxu0 0
    %1544 = vmatprep.subr.bf16.mxu0 0
    %1545 = vmatpush1.bf16.xpose.msra.mxu0 0
    %1546 = vmatprep.subr.bf16.mxu0 0
    %1547 = vmatpush1.bf16.xpose.msra.mxu0 0
    %1548 = vmatprep.subr.bf16.mxu0 0
    %1549 = vmatpush1.bf16.xpose.msra.mxu0 0
    %1550 = vmatprep.subr.bf16.mxu0 0
    %1551 = vmatpush1.bf16.xpose.msra.mxu0 0
    %1552 = vmatprep.subr.bf16.mxu0 0
    %1553 = vmatpush1.bf16.xpose.msra.mxu0 0
    %1554 = vmatprep.subr.bf16.mxu0 0
    %1555 = vmatpush1.bf16.xpose.msra.mxu0 0
    %1556 = vmatprep.subr.bf16.mxu0 0
    %1557 = vmatpush1.bf16.xpose.msra.mxu0 0
    %1558 = vmatprep.subr.bf16.mxu0 0
    %1559 = vmatpush1.bf16.xpose.msra.mxu0 0
    %1560 = vmatprep.subr.bf16.mxu0 0
    %1561 = vmatpush1.bf16.xpose.msra.mxu0 0
    %1562 = vmatprep.subr.bf16.mxu0 0
    %1563 = vmatpush1.bf16.xpose.msra.mxu0 0
    %1564 = vmatprep.subr.bf16.mxu0 0
    %1565 = vmatpush1.bf16.xpose.msra.mxu0 0
    %1566 = vmatprep.subr.bf16.mxu0 0
    %1567 = vmatpush1.bf16.xpose.msra.mxu0 0
    %1568 = vmatprep.mubr.bf16.mxu0 0
    %1569 = vmatmul.mubr.bf16.gmra.mrb[0].mxu0 %v1531
    %v1570 = vpop.f32.mrb[0].mxu0
    %v1571 = vadd.f32 %v1060, %v1570
    %v1572 = vpop.f32.mrb[0].mxu0
    %v1573 = vpop.f32.mrb[0].mxu0
    %v1574 = vpop.f32.mrb[0].mxu0
    %1575 = vdwg.mxu0
    %v1576 = vsel %vm476, %v1571, -inf
    %1577 = vmax.xlane.f32.xlu0 %v1576
    %v1578 = vpop.xlane.xlu0 %1577
    %v1579 = vsub.f32 %v1571, %v1578
    %v1580 = vmul.f32 %v1579, 1.442695
    %v1581 = vpow.pop %v1580
    %v1582 = vsel %vm476, %v1581, 0.0
    %1583 = vadd.xlane.f32.xlu0 %v1582
    %v1584 = vpop.xlane.xlu0 %1583
    %v1585 = vrcp.pop %v1584
    %v1586 = vmul.f32 %v1581, %v1585
    %v1587 = vpack.c.bf16 %v1586, %v1586
    %1588 = vrot.lane.b32.xlu0 %v422, 104
    %v1589 = vpop.permute.xlu0 %1588
    %v1592 = vsel %vm476, %v1587, 0
    %1594 = vmatprep.subr.bf16.mxu0 0
    %1595 = vmatpush1.bf16.msra.mxu0 %v1589
    %1596 = vmatprep.subr.bf16.mxu0 0
    %1597 = vmatpush1.bf16.msra.mxu0 0
    %1598 = vmatprep.subr.bf16.mxu0 0
    %1599 = vmatpush1.bf16.msra.mxu0 0
    %1600 = vmatprep.subr.bf16.mxu0 0
    %1601 = vmatpush1.bf16.msra.mxu0 0
    %1602 = vmatprep.subr.bf16.mxu0 0
    %1603 = vmatpush1.bf16.msra.mxu0 0
    %1604 = vmatprep.subr.bf16.mxu0 0
    %1605 = vmatpush1.bf16.msra.mxu0 0
    %1606 = vmatprep.subr.bf16.mxu0 0
    %1607 = vmatpush1.bf16.msra.mxu0 0
    %1608 = vmatprep.subr.bf16.mxu0 0
    %1609 = vmatpush1.bf16.msra.mxu0 0
    %1610 = vmatprep.subr.bf16.mxu0 0
    %1611 = vmatpush1.bf16.msra.mxu0 0
    %1612 = vmatprep.subr.bf16.mxu0 0
    %1613 = vmatpush1.bf16.msra.mxu0 0
    %1614 = vmatprep.subr.bf16.mxu0 0
    %1615 = vmatpush1.bf16.msra.mxu0 0
    %1616 = vmatprep.subr.bf16.mxu0 0
    %1617 = vmatpush1.bf16.msra.mxu0 0
    %1618 = vmatprep.subr.bf16.mxu0 0
    %1619 = vmatpush1.bf16.msra.mxu0 0
    %1620 = vmatprep.subr.bf16.mxu0 0
    %1621 = vmatpush1.bf16.msra.mxu0 0
    %1622 = vmatprep.subr.bf16.mxu0 0
    %1623 = vmatpush1.bf16.msra.mxu0 0
    %1624 = vmatprep.subr.bf16.mxu0 0
    %1625 = vmatpush1.bf16.msra.mxu0 0
    %1626 = vmatprep.mubr.bf16.mxu0 0
    %1627 = vmatmul.mubr.bf16.gmra.mrb[0].mxu0 %v1592
    %v1628 = vpop.f32.mrb[0].mxu0
    %v1629 = vadd.f32 0.0, %v1628
    %v1630 = vpop.f32.mrb[0].mxu0
    %v1631 = vpop.f32.mrb[0].mxu0
    %v1632 = vpop.f32.mrb[0].mxu0
    %1633 = vdwg.mxu0
    %v1634 = vpack.c.bf16 %v1629, %v1629
    %v1635 = vld [vmem:[#allocation10 + $0xc] sm:$0xf]
    %v1637 = vsel %vm429, %v1634, 0
    %v1640 = vsel %vm650, %v1635, 0
    %1642 = vmatprep.subr.bf16.mxu0 0
    %1643 = vmatpush1.bf16.msra.mxu0 %v1640
    %1644 = vmatprep.subr.bf16.mxu0 0
    %1645 = vmatpush1.bf16.msra.mxu0 0
    %1646 = vmatprep.subr.bf16.mxu0 0
    %1647 = vmatpush1.bf16.msra.mxu0 0
    %1648 = vmatprep.subr.bf16.mxu0 0
    %1649 = vmatpush1.bf16.msra.mxu0 0
    %1650 = vmatprep.subr.bf16.mxu0 0
    %1651 = vmatpush1.bf16.msra.mxu0 0
    %1652 = vmatprep.subr.bf16.mxu0 0
    %1653 = vmatpush1.bf16.msra.mxu0 0
    %1654 = vmatprep.subr.bf16.mxu0 0
    %1655 = vmatpush1.bf16.msra.mxu0 0
    %1656 = vmatprep.subr.bf16.mxu0 0
    %1657 = vmatpush1.bf16.msra.mxu0 0
    %1658 = vmatprep.subr.bf16.mxu0 0
    %1659 = vmatpush1.bf16.msra.mxu0 0
    %1660 = vmatprep.subr.bf16.mxu0 0
    %1661 = vmatpush1.bf16.msra.mxu0 0
    %1662 = vmatprep.subr.bf16.mxu0 0
    %1663 = vmatpush1.bf16.msra.mxu0 0
    %1664 = vmatprep.subr.bf16.mxu0 0
    %1665 = vmatpush1.bf16.msra.mxu0 0
    %1666 = vmatprep.subr.bf16.mxu0 0
    %1667 = vmatpush1.bf16.msra.mxu0 0
    %1668 = vmatprep.subr.bf16.mxu0 0
    %1669 = vmatpush1.bf16.msra.mxu0 0
    %1670 = vmatprep.subr.bf16.mxu0 0
    %1671 = vmatpush1.bf16.msra.mxu0 0
    %1672 = vmatprep.subr.bf16.mxu0 0
    %1673 = vmatpush1.bf16.msra.mxu0 0
    %1674 = vmatprep.mubr.bf16.mxu0 0
    %1675 = vmatmul.mubr.bf16.gmra.mrb[0].mxu0 %v1637
    %v1676 = vpop.f32.mrb[0].mxu0
    %v1677 = vadd.f32 0.0, %v1676
    %v1678 = vpop.f32.mrb[0].mxu0
    %v1679 = vpop.f32.mrb[0].mxu0
    %v1680 = vpop.f32.mrb[0].mxu0
    %1681 = vdwg.mxu0
    %v1682 = vadd.f32 %v1525, %v1677
    %v1683 = vld [vmem:[#allocation11 + $0x8] sm:$0xff]
    %v1684 = vadd.f32 %v1683, %v1682
    %1685 = vst [vmem:[#allocation11 + $0x8] sm:$0xff] %v1684
    // Predicated region
    $region74: #{tpu_custom_call.1} parent=1 // pred_check
      _
    $region75: #{tpu_custom_call.1} parent=1 // pred_check_branch
      %1687 = sbr.rel (0) target = $region77
    $region76: #{tpu_custom_call.1} parent=1 // pred_region
      %s1689 = ssub.s32 256, 256
      %1690 = vsyncadd [#allocation4], %s1689
      %s1691 = sshll.u32 [#allocation11], 4
      %s1692 = int_to_ptr.vmem [resolvable:$true] %s1691
      %1697 = dma.vmem_to_hbm [thread:$0]  %s1692, 256, %s13, [#allocation4], 128, 128, 8
    $region77: #{tpu_custom_call.1} parent=1 // pred_fallthru
      _
    // Predicated region
    $region78: #{tpu_custom_call.1} parent=1 // pred_check
      _
    $region79: #{tpu_custom_call.1} parent=1 // pred_check_branch
      %1699 = sbr.rel (0) target = $region81
    $region80: #{tpu_custom_call.1} parent=1 // pred_region
      %1700 = dma.done [#allocation4], 256
    $region81: #{tpu_custom_call.1} parent=1 // pred_fallthru
      _
    %1701 = vsyncpa [#allocation3], 1
    %1702 = vsyncpa [#allocation6], 1
    %1703 = vsyncpa [#allocation9], 1
    %1704 = vsyncpa [#allocation4], 1

</llo_original>
